<compile_context>
chip_gen: v7x
topology: tpu7x:2x2x1
jax: 0.10.0
libtpu: 0.0.40
codegen_flags: <defaults>
</compile_context>

<pallas_src>
import math

import jax
import jax.numpy as jnp
from jax.experimental import pallas as pl
from jax.experimental.pallas import tpu as pltpu

_SQRT_HALF = math.sqrt(0.5)


def _gelu_exact(x):
    # PyTorch nn.GELU() (approximate='none'): 0.5*x*(1+erf(x/sqrt(2)))
    return 0.5 * x * (1.0 + jax.lax.erf(x * _SQRT_HALF))


def _spatial_tile(n):
    """Largest lane-dense (multiple-of-128) tile of the spatial dim, preferring >=2 grid steps."""
    for t in (512, 256, 128):
        if n % t == 0 and n // t >= 2:
            return t
    if n % 128 == 0:
        return 128
    return n  # full-dim block (always legal), only hit for tiny / odd spatial sizes


# ---------------------------------------------------------------------------
# Fused CMlp kernel:  y = W2 @ gelu(W1 @ x + b1) + b2   on a (C, tn) spatial tile
# ---------------------------------------------------------------------------
def _cmlp_kernel(x_ref, w1_ref, b1_ref, w2_ref, b2_ref, o_ref):
    x = x_ref[0].astype(jnp.bfloat16)                     # (C_in, tn)
    # fc1 (1x1 conv): (hidden, C_in) @ (C_in, tn) -> (hidden, tn), f32 accumulation on MXU
    h = jnp.dot(w1_ref[...], x, preferred_element_type=jnp.float32)
    h = h + b1_ref[...]                                   # (hidden, 1) broadcast over lanes
    h = _gelu_exact(h)                                    # exact erf GELU, f32 on VPU
    # fc2 (1x1 conv): (C_out, hidden) @ (hidden, tn) -> (C_out, tn)
    y = jnp.dot(w2_ref[...], h.astype(jnp.bfloat16), preferred_element_type=jnp.float32)
    y = y + b2_ref[...]                                   # (C_out, 1) broadcast
    o_ref[0] = y.astype(o_ref.dtype)


def cmlp_forward(x_nchw, params):
    """CMlp forward. x_nchw: (B, C_in, H, W). Weights use PyTorch conv layout (out, in)."""
    B, C, H, W = x_nchw.shape
    HW = H * W
    w1, b1 = params["w1"], params["b1"]                   # (hidden, C_in), (hidden,)
    w2, b2 = params["w2"], params["b2"]                   # (C_out, hidden), (C_out,)
    hidden = w1.shape[0]
    c_out = w2.shape[0]

    x = x_nchw.reshape(B, C, HW)                          # free reshape, stays NCHW
    tn = _spatial_tile(HW)
    grid = (B, HW // tn)

    out = pl.pallas_call(
        _cmlp_kernel,
        out_shape=jax.ShapeDtypeStruct((B, c_out, HW), x_nchw.dtype),
        grid=grid,
        in_specs=[
            pl.BlockSpec((1, C, tn), lambda b, j: (b, 0, j)),
            pl.BlockSpec((hidden, C), lambda b, j: (0, 0)),
            pl.BlockSpec((hidden, 1), lambda b, j: (0, 0)),
            pl.BlockSpec((c_out, hidden), lambda b, j: (0, 0)),
            pl.BlockSpec((c_out, 1), lambda b, j: (0, 0)),
        ],
        out_specs=pl.BlockSpec((1, c_out, tn), lambda b, j: (b, 0, j)),
        compiler_params=pltpu.CompilerParams(
            dimension_semantics=("parallel", "parallel"),
        ),
    )(
        x,
        w1.astype(jnp.bfloat16),                          # bf16 weights: 2x MXU rate, half the DMA
        b1.reshape(hidden, 1).astype(jnp.float32),
        w2.astype(jnp.bfloat16),
        b2.reshape(c_out, 1).astype(jnp.float32),
    )
    return out.reshape(B, c_out, H, W)


# ---------------------------------------------------------------------------
# Parameters (PyTorch Conv2d 1x1 weights with the trailing (1,1) squeezed off)
# ---------------------------------------------------------------------------
def init_params(key, in_features, hidden_features=None, out_features=None):
    hidden_features = hidden_features or in_features
    out_features = out_features or in_features
    k1, k2, k3, k4 = jax.random.split(key, 4)
    return {
        "w1": 0.05 * jax.random.normal(k1, (hidden_features, in_features), dtype=jnp.float32),
        "b1": 0.02 * jax.random.normal(k2, (hidden_features,), dtype=jnp.float32),
        "w2": 0.05 * jax.random.normal(k3, (out_features, hidden_features), dtype=jnp.float32),
        "b2": 0.02 * jax.random.normal(k4, (out_features,), dtype=jnp.float32),
    }


if __name__ == "__main__":
    key = jax.random.PRNGKey(0)
    kx, kp = jax.random.split(key)

    B, C, H, W = 2, 128, 16, 16          # lane-friendly channel count, small spatial
    HIDDEN = 4 * C                       # typical mlp_ratio=4 hidden width
    x = jax.random.normal(kx, (B, C, H, W), dtype=jnp.float32)
    params = init_params(kp, in_features=C, hidden_features=HIDDEN, out_features=C)

    fwd = jax.jit(cmlp_forward)
    out = jax.block_until_ready(fwd(x, params))

    assert out.shape == (B, C, H, W), out.shape
    assert bool(jnp.all(jnp.isfinite(out)))

    # Pure-JAX f32 reference (exact-erf GELU); bf16 MXU inputs keep error well below tol.
    xr = x.reshape(B, C, H * W)
    h = jnp.einsum("oc,bcn->bon", params["w1"], xr) + params["b1"][None, :, None]
    h = 0.5 * h * (1.0 + jax.lax.erf(h * _SQRT_HALF))
    ref = jnp.einsum("oh,bhn->bon", params["w2"], h) + params["b2"][None, :, None]
    ref = ref.reshape(B, C, H, W)
    max_err = float(jnp.max(jnp.abs(out - ref)))
    assert max_err < 0.1, max_err

    print("KERNEL_OK")
</pallas_src>

<mosaic_0001>
module attributes {stable_mosaic.version = 11 : i64} {
  func.func @_cmlp_kernel(%arg0: i32, %arg1: i32, %arg2: memref<1x128x128xf32, #tpu.memory_space<vmem>>, %arg3: memref<512x128xbf16, #tpu.memory_space<vmem>>, %arg4: memref<512x1xf32, #tpu.memory_space<vmem>>, %arg5: memref<128x512xbf16, #tpu.memory_space<vmem>>, %arg6: memref<128x1xf32, #tpu.memory_space<vmem>>, %arg7: memref<1x128x128xf32, #tpu.memory_space<vmem>>) attributes {dimension_semantics = [#tpu.dimension_semantics<parallel>, #tpu.dimension_semantics<parallel>], iteration_bounds = array<i64: 2, 2>, scalar_prefetch = 0 : i64, scratch_operands = 0 : i64, tpu.core_type = #tpu.core_type<tc>, window_params = [{transform_indices = @transform_0, window_bounds = array<i64: 1, 128, 128>}, {pipeline_mode = #tpu.pipeline_mode<synchronous>, transform_indices = @transform_1, window_bounds = array<i64: 512, 128>}, {pipeline_mode = #tpu.pipeline_mode<synchronous>, transform_indices = @transform_2, window_bounds = array<i64: 512, 1>}, {pipeline_mode = #tpu.pipeline_mode<synchronous>, transform_indices = @transform_3, window_bounds = array<i64: 128, 512>}, {pipeline_mode = #tpu.pipeline_mode<synchronous>, transform_indices = @transform_4, window_bounds = array<i64: 128, 1>}, {transform_indices = @transform_5, window_bounds = array<i64: 1, 128, 128>}]} {
    %c0 = arith.constant 0 : index
    %c0_0 = arith.constant 0 : index
    %c0_1 = arith.constant 0 : index
    %0 = vector.load %arg2[%c0, %c0_0, %c0_1] : memref<1x128x128xf32, #tpu.memory_space<vmem>>, vector<1x128x128xf32>
    %1 = vector.shape_cast %0 : vector<1x128x128xf32> to vector<128x128xf32>
    %2 = arith.truncf %1 : vector<128x128xf32> to vector<128x128xbf16>
    %c0_2 = arith.constant 0 : index
    %c0_3 = arith.constant 0 : index
    %3 = vector.load %arg3[%c0_2, %c0_3] : memref<512x128xbf16, #tpu.memory_space<vmem>>, vector<512x128xbf16>
    %cst = arith.constant dense<0.000000e+00> : vector<512x128xf32>
    %4 = tpu.matmul %3, %2, %cst {dimension_numbers = #tpu.dot_dimension_numbers<[1], [0], [0], [1], [0, 0, 1, 1], [], []>} : vector<512x128xbf16>, vector<128x128xbf16>, vector<512x128xf32> -> vector<512x128xf32>
    %c0_4 = arith.constant 0 : index
    %c0_5 = arith.constant 0 : index
    %5 = vector.load %arg4[%c0_4, %c0_5] : memref<512x1xf32, #tpu.memory_space<vmem>>, vector<512x1xf32>
    %6 = vector.broadcast %5 : vector<512x1xf32> to vector<512x128xf32>
    %7 = arith.addf %4, %6 : vector<512x128xf32>
    %cst_6 = arith.constant 5.000000e-01 : f32
    %8 = vector.broadcast %cst_6 : f32 to vector<512x128xf32>
    %9 = arith.mulf %8, %7 : vector<512x128xf32>
    %cst_7 = arith.constant 0.707106769 : f32
    %10 = vector.broadcast %cst_7 : f32 to vector<512x128xf32>
    %11 = arith.mulf %7, %10 : vector<512x128xf32>
    %12 = math.erf %11 : vector<512x128xf32>
    %cst_8 = arith.constant 1.000000e+00 : f32
    %13 = vector.broadcast %cst_8 : f32 to vector<512x128xf32>
    %14 = arith.addf %13, %12 : vector<512x128xf32>
    %15 = arith.mulf %9, %14 : vector<512x128xf32>
    %c0_9 = arith.constant 0 : index
    %c0_10 = arith.constant 0 : index
    %16 = vector.load %arg5[%c0_9, %c0_10] : memref<128x512xbf16, #tpu.memory_space<vmem>>, vector<128x512xbf16>
    %17 = arith.truncf %15 : vector<512x128xf32> to vector<512x128xbf16>
    %cst_11 = arith.constant dense<0.000000e+00> : vector<128x128xf32>
    %18 = tpu.matmul %16, %17, %cst_11 {dimension_numbers = #tpu.dot_dimension_numbers<[1], [0], [0], [1], [0, 0, 1, 1], [], []>} : vector<128x512xbf16>, vector<512x128xbf16>, vector<128x128xf32> -> vector<128x128xf32>
    %c0_12 = arith.constant 0 : index
    %c0_13 = arith.constant 0 : index
    %19 = vector.load %arg6[%c0_12, %c0_13] : memref<128x1xf32, #tpu.memory_space<vmem>>, vector<128x1xf32>
    %20 = vector.broadcast %19 : vector<128x1xf32> to vector<128x128xf32>
    %21 = arith.addf %18, %20 : vector<128x128xf32>
    %c0_14 = arith.constant 0 : index
    %c0_15 = arith.constant 0 : index
    %c0_16 = arith.constant 0 : index
    %22 = vector.load %arg7[%c0_14, %c0_15, %c0_16] : memref<1x128x128xf32, #tpu.memory_space<vmem>>, vector<1x128x128xf32>
    %23 = vector.shape_cast %22 : vector<1x128x128xf32> to vector<128x128xf32>
    %24 = vector.shape_cast %21 : vector<128x128xf32> to vector<1x128x128xf32>
    tpu.vector_store %arg7[%c0_14, %c0_15, %c0_16], %24 {strides = array<i32>} : memref<1x128x128xf32, #tpu.memory_space<vmem>>, vector<1x128x128xf32>,
    return
  }
  func.func @transform_0(%arg0: i32, %arg1: i32) -> (i32, i32, i32) {
    %c0_i32 = arith.constant 0 : i32
    %c0_i32_0 = arith.constant 0 : i32
    return %arg0, %c0_i32, %arg1 : i32, i32, i32
  }
  func.func @transform_1(%arg0: i32, %arg1: i32) -> (i32, i32) {
    %c0_i32 = arith.constant 0 : i32
    %c0_i32_0 = arith.constant 0 : i32
    %c0_i32_1 = arith.constant 0 : i32
    return %c0_i32, %c0_i32_0 : i32, i32
  }
  func.func @transform_2(%arg0: i32, %arg1: i32) -> (i32, i32) {
    %c0_i32 = arith.constant 0 : i32
    %c0_i32_0 = arith.constant 0 : i32
    %c0_i32_1 = arith.constant 0 : i32
    return %c0_i32, %c0_i32_0 : i32, i32
  }
  func.func @transform_3(%arg0: i32, %arg1: i32) -> (i32, i32) {
    %c0_i32 = arith.constant 0 : i32
    %c0_i32_0 = arith.constant 0 : i32
    %c0_i32_1 = arith.constant 0 : i32
    return %c0_i32, %c0_i32_0 : i32, i32
  }
  func.func @transform_4(%arg0: i32, %arg1: i32) -> (i32, i32) {
    %c0_i32 = arith.constant 0 : i32
    %c0_i32_0 = arith.constant 0 : i32
    %c0_i32_1 = arith.constant 0 : i32
    return %c0_i32, %c0_i32_0 : i32, i32
  }
  func.func @transform_5(%arg0: i32, %arg1: i32) -> (i32, i32, i32) {
    %c0_i32 = arith.constant 0 : i32
    %c0_i32_0 = arith.constant 0 : i32
    return %arg0, %c0_i32, %arg1 : i32, i32, i32
  }
}

</mosaic_0001>

<llo_original>
// kernel: cmlp_forward.1
$region0: #{cmlp_forward.1}
  #allocation0 [shape = 'u32[]', space=smem, size = 0x4, offset = 0x4, fixed_abs, tag = 'smem constant byte address 0x4 - core index']
  #allocation1 [shape = 'u32[144,128]{1,0:T(1,128)}', space=vmem, size = 0x12000, scoped, tag = 'internal scratch']
  %s0 = inlined_call_operand.vmem [shape: f32[2,128,256], index: 0, kind: input, shape index: {}]
  %s1 = inlined_call_operand.vmem [shape: bf16[512,128], index: 1, kind: input, shape index: {}]
  %s2 = inlined_call_operand.vmem [shape: f32[512,1], index: 2, kind: input, shape index: {}]
  %s3 = inlined_call_operand.vmem [shape: bf16[128,512], index: 3, kind: input, shape index: {}]
  %s4 = inlined_call_operand.vmem [shape: f32[128,1], index: 4, kind: input, shape index: {}]
  %s5 = inlined_call_operand.vmem [shape: f32[2,128,256], index: 5, kind: output, shape index: {}]
  %s6 = sld [smem:[#allocation0]]
  $region125: #{cmlp_forward.1} parent=0
    _
  %s8 = ssub.s32 1, %s6
  %s9 = scalar_select 0, %s8, %s6
  $region1: #{cmlp_forward.1} parent=0
    #allocation2 [shape = 'u8[131072]{0}', space=vmem, size = 0x20000, scoped, tag = 'input window, operand 0']
    #allocation3 [shape = 'u8[131072]{0}', space=vmem, size = 0x20000, scoped, tag = 'output window, operand 0']
    loop: start=0, step=1, limit=6
    $region2: #{cmlp_forward.1} parent=1 // loop_pre_header
      _
    $region3: #{cmlp_forward.1} parent=1 // loop_header
      %s11 = sphi 0, %s15
      %p12 = scmp.ge.s32.totalorder %s11, 6
      %s18 = sphi 0, %s30
      %s19 = sphi 0, %s26
      %s20 = sphi 0, %s18
      %s21 = sphi 0, %s19
      %s22 = sphi 0, %s20
      %s23 = sphi 0, %s21
      %s35 = sphi 0, %s37
      %s38 = sphi 0, %s35
      %s39 = sphi 0, %s38
      %s55 = sphi 0, %s39
      %s59 = sphi 0, %s59
      %s61 = sphi 0, %s59
      %s62 = sphi 0, %s61
      %s76 = sphi 0, %s62
      %s80 = sphi 0, %s80
      %s82 = sphi 0, %s80
      %s83 = sphi 0, %s82
      %s97 = sphi 0, %s83
      %s101 = sphi 0, %s101
      %s103 = sphi 0, %s101
      %s104 = sphi 0, %s103
      %s118 = sphi 0, %s104
      %s122 = sphi 0, %s122
      %s124 = sphi 0, %s122
      %s125 = sphi 0, %s124
      %s139 = sphi 0, %s125
      %s147 = sphi 0, %s149
      %s150 = sphi 0, %s147
      %s151 = sphi 0, %s150
      %s167 = sphi 0, %s151
    $region4: #{cmlp_forward.1} parent=1 // loop_header_branch
      %14 = sbr.rel (%p12) target = $region8
    $region5: #{cmlp_forward.1} parent=1 // loop_body
      %s16 = ssub.s32 %s11, 1
      %s17 = ssub.s32 %s11, 2
      %s24 = sadd.s32 1, %s19
      %p25 = scmp.ge.s32.totalorder %s24, 2
      %s26 = scalar_select %p25, 0, %s24
      %s27 = sadd.s32 1, %s18
      %s28 = scalar_select %p25, %s27, %s18
      %p29 = scmp.ge.s32.totalorder %s28, 2
      %s30 = scalar_select %p29, 0, %s28
      %s31 = ssub.s32 %s18, %s30
      %s32 = ssub.s32 %s19, %s26
      %s33 = sor.u32 %s31, %s32
      %p34 = scmp.eq.s32.totalorder %s33, 0
      %s36 = sadd.s32 %s35, 1
      %s37 = scalar_select %p34, %s35, %s36
      %p40 = pneg %p34
      %p41 = scmp.eq.s32.totalorder %s11, 3
      %p42 = por %p40, %p41
      %p43 = scmp.ne.s32.totalorder %s35, %s38
      %p44 = scmp.eq.s32.totalorder %s11, 0
      %p45 = por %p43, %p44
      %p46 = scmp.ne.s32.totalorder %s35, %s38
      %p47 = scmp.eq.s32.totalorder %s16, 3
      %p48 = por %p46, %p47
      %p49 = scmp.ne.s32.totalorder %s38, %s39
      %p50 = scmp.eq.s32.totalorder %s16, 0
      %p51 = por %p49, %p50
      %p52 = scmp.ne.s32.totalorder %s38, %s39
      %p53 = scmp.eq.s32.totalorder %s17, 3
      %p54 = por %p52, %p53
      %p56 = scmp.ne.s32.totalorder %s39, %s55
      %p57 = scmp.eq.s32.totalorder %s17, 0
      %p58 = por %p56, %p57
      %s60 = sadd.s32 %s59, 1
      %p63 = scmp.eq.s32.totalorder %s11, 3
      %p64 = scmp.ne.s32.totalorder %s59, %s61
      %p65 = scmp.eq.s32.totalorder %s11, 0
      %p66 = por %p64, %p65
      %p67 = scmp.ne.s32.totalorder %s59, %s61
      %p68 = scmp.eq.s32.totalorder %s16, 3
      %p69 = por %p67, %p68
      %p70 = scmp.ne.s32.totalorder %s61, %s62
      %p71 = scmp.eq.s32.totalorder %s16, 0
      %p72 = por %p70, %p71
      %p73 = scmp.ne.s32.totalorder %s61, %s62
      %p74 = scmp.eq.s32.totalorder %s17, 3
      %p75 = por %p73, %p74
      %p77 = scmp.ne.s32.totalorder %s62, %s76
      %p78 = scmp.eq.s32.totalorder %s17, 0
      %p79 = por %p77, %p78
      %s81 = sadd.s32 %s80, 1
      %p84 = scmp.eq.s32.totalorder %s11, 3
      %p85 = scmp.ne.s32.totalorder %s80, %s82
      %p86 = scmp.eq.s32.totalorder %s11, 0
      %p87 = por %p85, %p86
      %p88 = scmp.ne.s32.totalorder %s80, %s82
      %p89 = scmp.eq.s32.totalorder %s16, 3
      %p90 = por %p88, %p89
      %p91 = scmp.ne.s32.totalorder %s82, %s83
      %p92 = scmp.eq.s32.totalorder %s16, 0
      %p93 = por %p91, %p92
      %p94 = scmp.ne.s32.totalorder %s82, %s83
      %p95 = scmp.eq.s32.totalorder %s17, 3
      %p96 = por %p94, %p95
      %p98 = scmp.ne.s32.totalorder %s83, %s97
      %p99 = scmp.eq.s32.totalorder %s17, 0
      %p100 = por %p98, %p99
      %s102 = sadd.s32 %s101, 1
      %p105 = scmp.eq.s32.totalorder %s11, 3
      %p106 = scmp.ne.s32.totalorder %s101, %s103
      %p107 = scmp.eq.s32.totalorder %s11, 0
      %p108 = por %p106, %p107
      %p109 = scmp.ne.s32.totalorder %s101, %s103
      %p110 = scmp.eq.s32.totalorder %s16, 3
      %p111 = por %p109, %p110
      %p112 = scmp.ne.s32.totalorder %s103, %s104
      %p113 = scmp.eq.s32.totalorder %s16, 0
      %p114 = por %p112, %p113
      %p115 = scmp.ne.s32.totalorder %s103, %s104
      %p116 = scmp.eq.s32.totalorder %s17, 3
      %p117 = por %p115, %p116
      %p119 = scmp.ne.s32.totalorder %s104, %s118
      %p120 = scmp.eq.s32.totalorder %s17, 0
      %p121 = por %p119, %p120
      %s123 = sadd.s32 %s122, 1
      %p126 = scmp.eq.s32.totalorder %s11, 3
      %p127 = scmp.ne.s32.totalorder %s122, %s124
      %p128 = scmp.eq.s32.totalorder %s11, 0
      %p129 = por %p127, %p128
      %p130 = scmp.ne.s32.totalorder %s122, %s124
      %p131 = scmp.eq.s32.totalorder %s16, 3
      %p132 = por %p130, %p131
      %p133 = scmp.ne.s32.totalorder %s124, %s125
      %p134 = scmp.eq.s32.totalorder %s16, 0
      %p135 = por %p133, %p134
      %p136 = scmp.ne.s32.totalorder %s124, %s125
      %p137 = scmp.eq.s32.totalorder %s17, 3
      %p138 = por %p136, %p137
      %p140 = scmp.ne.s32.totalorder %s125, %s139
      %p141 = scmp.eq.s32.totalorder %s17, 0
      %p142 = por %p140, %p141
      %s143 = ssub.s32 %s18, %s30
      %s144 = ssub.s32 %s19, %s26
      %s145 = sor.u32 %s143, %s144
      %p146 = scmp.eq.s32.totalorder %s145, 0
      %s148 = sadd.s32 %s147, 1
      %s149 = scalar_select %p146, %s147, %s148
      %p152 = pneg %p146
      %p153 = scmp.eq.s32.totalorder %s11, 3
      %p154 = por %p152, %p153
      %p155 = scmp.ne.s32.totalorder %s147, %s150
      %p156 = scmp.eq.s32.totalorder %s11, 0
      %p157 = por %p155, %p156
      %p158 = scmp.ne.s32.totalorder %s147, %s150
      %p159 = scmp.eq.s32.totalorder %s16, 3
      %p160 = por %p158, %p159
      %p161 = scmp.ne.s32.totalorder %s150, %s151
      %p162 = scmp.eq.s32.totalorder %s16, 0
      %p163 = por %p161, %p162
      %p164 = scmp.ne.s32.totalorder %s150, %s151
      %p165 = scmp.eq.s32.totalorder %s17, 3
      %p166 = por %p164, %p165
      %p168 = scmp.ne.s32.totalorder %s151, %s167
      %p169 = scmp.eq.s32.totalorder %s17, 0
      %p170 = por %p168, %p169
      %p171 = scmp.le.s32.totalorder 1, %s11
      %p172 = scmp.lt.s32.totalorder %s11, 5
      %p173 = pnand %p171, %p172
      %p174 = pneg %p173
      // Predicated region
      $region9: #{cmlp_forward.1} parent=5 // pred_check
        _
      $region10: #{cmlp_forward.1} parent=5 // pred_check_branch
        %176 = sbr.rel (%p173) target = $region12
      $region11: #{cmlp_forward.1} parent=5 // pred_region
        %s177 = ssub.s32 %s11, 1
        // Predicated region
        $region13: #{cmlp_forward.1} parent=11 // pred_check
          %p178 = pneg %p72
        $region14: #{cmlp_forward.1} parent=11 // pred_check_branch
          %180 = sbr.rel (%p178) target = $region16
        $region15: #{cmlp_forward.1} parent=11 // pred_region
          _
        $region16: #{cmlp_forward.1} parent=11 // pred_fallthru
          _
        // Predicated region
        $region17: #{cmlp_forward.1} parent=11 // pred_check
          %p181 = pneg %p93
        $region18: #{cmlp_forward.1} parent=11 // pred_check_branch
          %183 = sbr.rel (%p181) target = $region20
        $region19: #{cmlp_forward.1} parent=11 // pred_region
          _
        $region20: #{cmlp_forward.1} parent=11 // pred_fallthru
          _
        // Predicated region
        $region21: #{cmlp_forward.1} parent=11 // pred_check
          %p184 = pneg %p114
        $region22: #{cmlp_forward.1} parent=11 // pred_check_branch
          %186 = sbr.rel (%p184) target = $region24
        $region23: #{cmlp_forward.1} parent=11 // pred_region
          _
        $region24: #{cmlp_forward.1} parent=11 // pred_fallthru
          _
        // Predicated region
        $region25: #{cmlp_forward.1} parent=11 // pred_check
          %p187 = pneg %p135
        $region26: #{cmlp_forward.1} parent=11 // pred_check_branch
          %189 = sbr.rel (%p187) target = $region28
        $region27: #{cmlp_forward.1} parent=11 // pred_region
          _
        $region28: #{cmlp_forward.1} parent=11 // pred_fallthru
          _
      $region12: #{cmlp_forward.1} parent=5 // pred_fallthru
        _
      %p190 = scmp.lt.s32.totalorder %s11, 4
      // Predicated region
      $region29: #{cmlp_forward.1} parent=5 // pred_check
        %p191 = pneg %p190
      $region30: #{cmlp_forward.1} parent=5 // pred_check_branch
        %193 = sbr.rel (%p191) target = $region32
      $region31: #{cmlp_forward.1} parent=5 // pred_region
        // Predicated region
        $region33: #{cmlp_forward.1} parent=31 // pred_check
          %p194 = pneg %p45
        $region34: #{cmlp_forward.1} parent=31 // pred_check_branch
          %196 = sbr.rel (%p194) target = $region36
        $region35: #{cmlp_forward.1} parent=31 // pred_region
          %s197 = sand.u32 %s35, 1
          %s198 = sand.u32 %s35, 1
          %s199 = smul.addr %s198, 128
          %s200 = scalar_lea.vmem [#allocation2], %s199
          %s201 = smul.addr %s18, 32
          %s202 = sadd.s32 %s19, %s201
          %s203 = smul.addr %s202, 8
          %s204 = scalar_lea.vmem %s0, %s203
          // Predicated region
          $region37: #{cmlp_forward.1} parent=35 // pred_check
            _
          $region38: #{cmlp_forward.1} parent=35 // pred_check_branch
            %206 = sbr.rel (0) target = $region40
          $region39: #{cmlp_forward.1} parent=35 // pred_region
            // Predicated region
            $region41: #{cmlp_forward.1} parent=39 // pred_check
              _
            $region42: #{cmlp_forward.1} parent=39 // pred_check_branch
              %208 = sbr.rel (0) target = $region44
            $region43: #{cmlp_forward.1} parent=39 // pred_region
              // Predicated region
              $region56: #{cmlp_forward.1} parent=43 // pred_check
                _
              $region57: #{cmlp_forward.1} parent=43 // pred_check_branch
                %253 = sbr.rel (0) target = $region59
              $region58: #{cmlp_forward.1} parent=43 // pred_region
                loop: start=0, step=1, limit=1
                $region60: #{cmlp_forward.1} parent=58 // loop_pre_header
                  _
                $region61: #{cmlp_forward.1} parent=58 // loop_header
                  %s255 = sphi 0, %s259
                  %p256 = scmp.ge.s32.totalorder %s255, 1
                  %s260 = sphi %s204, %s204
                  %s261 = sphi %s200, %s200
                $region62: #{cmlp_forward.1} parent=58 // loop_header_branch
                  %258 = sbr.rel (%p256) target = $region66
                $region63: #{cmlp_forward.1} parent=58 // loop_body
                  %v262 = vld [vmem:[%s260] sm:$0xff]
                  %263 = vst [vmem:[%s261] sm:$0xff] %v262
                  %v264 = vld [vmem:[%s260 + $0x10] sm:$0xff]
                  %265 = vst [vmem:[%s261 + $0x8] sm:$0xff] %v264
                  %v266 = vld [vmem:[%s260 + $0x20] sm:$0xff]
                  %267 = vst [vmem:[%s261 + $0x10] sm:$0xff] %v266
                  %v268 = vld [vmem:[%s260 + $0x30] sm:$0xff]
                  %269 = vst [vmem:[%s261 + $0x18] sm:$0xff] %v268
                  %v270 = vld [vmem:[%s260 + $0x40] sm:$0xff]
                  %271 = vst [vmem:[%s261 + $0x20] sm:$0xff] %v270
                  %v272 = vld [vmem:[%s260 + $0x50] sm:$0xff]
                  %273 = vst [vmem:[%s261 + $0x28] sm:$0xff] %v272
                  %v274 = vld [vmem:[%s260 + $0x60] sm:$0xff]
                  %275 = vst [vmem:[%s261 + $0x30] sm:$0xff] %v274
                  %v276 = vld [vmem:[%s260 + $0x70] sm:$0xff]
                  %277 = vst [vmem:[%s261 + $0x38] sm:$0xff] %v276
                  %v278 = vld [vmem:[%s260 + $0x80] sm:$0xff]
                  %279 = vst [vmem:[%s261 + $0x40] sm:$0xff] %v278
                  %v280 = vld [vmem:[%s260 + $0x90] sm:$0xff]
                  %281 = vst [vmem:[%s261 + $0x48] sm:$0xff] %v280
                  %v282 = vld [vmem:[%s260 + $0xa0] sm:$0xff]
                  %283 = vst [vmem:[%s261 + $0x50] sm:$0xff] %v282
                  %v284 = vld [vmem:[%s260 + $0xb0] sm:$0xff]
                  %285 = vst [vmem:[%s261 + $0x58] sm:$0xff] %v284
                  %v286 = vld [vmem:[%s260 + $0xc0] sm:$0xff]
                  %287 = vst [vmem:[%s261 + $0x60] sm:$0xff] %v286
                  %v288 = vld [vmem:[%s260 + $0xd0] sm:$0xff]
                  %289 = vst [vmem:[%s261 + $0x68] sm:$0xff] %v288
                  %v290 = vld [vmem:[%s260 + $0xe0] sm:$0xff]
                  %291 = vst [vmem:[%s261 + $0x70] sm:$0xff] %v290
                  %v292 = vld [vmem:[%s260 + $0xf0] sm:$0xff]
                  %293 = vst [vmem:[%s261 + $0x78] sm:$0xff] %v292
                $region64: #{cmlp_forward.1} parent=58 // loop_footer
                  %s259 = sadd.s32 1, %s255
                $region65: #{cmlp_forward.1} parent=58 // loop_footer_branch
                  %254 = sbr.rel target = $region61
                $region66: #{cmlp_forward.1} parent=58 // loop_exit
                  _
              $region59: #{cmlp_forward.1} parent=43 // pred_fallthru
                _
              // Predicated region
              $region67: #{cmlp_forward.1} parent=43 // pred_check
                _
              $region68: #{cmlp_forward.1} parent=43 // pred_check_branch
                %295 = sbr.rel target = $region70
              $region69: #{cmlp_forward.1} parent=43 // pred_region
                _
              $region70: #{cmlp_forward.1} parent=43 // pred_fallthru
                _
            $region44: #{cmlp_forward.1} parent=39 // pred_fallthru
              _
            // Predicated region
            $region45: #{cmlp_forward.1} parent=39 // pred_check
              _
            $region46: #{cmlp_forward.1} parent=39 // pred_check_branch
              %210 = sbr.rel target = $region48
            $region47: #{cmlp_forward.1} parent=39 // pred_region
              loop: start=0, step=1, limit=1
              $region49: #{cmlp_forward.1} parent=47 // loop_pre_header
                _
              $region50: #{cmlp_forward.1} parent=47 // loop_header
                %s213 = sphi 0, %s217
                %p214 = scmp.ge.s32.totalorder %s213, 1
                %s218 = sphi %s204, %s204
                %s219 = sphi %s200, %s200
              $region51: #{cmlp_forward.1} parent=47 // loop_header_branch
                %216 = sbr.rel (%p214) target = $region55
              $region52: #{cmlp_forward.1} parent=47 // loop_body
                %v220 = vld [vmem:[%s218] sm:$0xff]
                %221 = vst [vmem:[%s219] sm:$0xff] %v220
                %v222 = vld [vmem:[%s218 + $0x10] sm:$0xff]
                %223 = vst [vmem:[%s219 + $0x8] sm:$0xff] %v222
                %v224 = vld [vmem:[%s218 + $0x20] sm:$0xff]
                %225 = vst [vmem:[%s219 + $0x10] sm:$0xff] %v224
                %v226 = vld [vmem:[%s218 + $0x30] sm:$0xff]
                %227 = vst [vmem:[%s219 + $0x18] sm:$0xff] %v226
                %v228 = vld [vmem:[%s218 + $0x40] sm:$0xff]
                %229 = vst [vmem:[%s219 + $0x20] sm:$0xff] %v228
                %v230 = vld [vmem:[%s218 + $0x50] sm:$0xff]
                %231 = vst [vmem:[%s219 + $0x28] sm:$0xff] %v230
                %v232 = vld [vmem:[%s218 + $0x60] sm:$0xff]
                %233 = vst [vmem:[%s219 + $0x30] sm:$0xff] %v232
                %v234 = vld [vmem:[%s218 + $0x70] sm:$0xff]
                %235 = vst [vmem:[%s219 + $0x38] sm:$0xff] %v234
                %v236 = vld [vmem:[%s218 + $0x80] sm:$0xff]
                %237 = vst [vmem:[%s219 + $0x40] sm:$0xff] %v236
                %v238 = vld [vmem:[%s218 + $0x90] sm:$0xff]
                %239 = vst [vmem:[%s219 + $0x48] sm:$0xff] %v238
                %v240 = vld [vmem:[%s218 + $0xa0] sm:$0xff]
                %241 = vst [vmem:[%s219 + $0x50] sm:$0xff] %v240
                %v242 = vld [vmem:[%s218 + $0xb0] sm:$0xff]
                %243 = vst [vmem:[%s219 + $0x58] sm:$0xff] %v242
                %v244 = vld [vmem:[%s218 + $0xc0] sm:$0xff]
                %245 = vst [vmem:[%s219 + $0x60] sm:$0xff] %v244
                %v246 = vld [vmem:[%s218 + $0xd0] sm:$0xff]
                %247 = vst [vmem:[%s219 + $0x68] sm:$0xff] %v246
                %v248 = vld [vmem:[%s218 + $0xe0] sm:$0xff]
                %249 = vst [vmem:[%s219 + $0x70] sm:$0xff] %v248
                %v250 = vld [vmem:[%s218 + $0xf0] sm:$0xff]
                %251 = vst [vmem:[%s219 + $0x78] sm:$0xff] %v250
              $region53: #{cmlp_forward.1} parent=47 // loop_footer
                %s217 = sadd.s32 1, %s213
              $region54: #{cmlp_forward.1} parent=47 // loop_footer_branch
                %212 = sbr.rel target = $region50
              $region55: #{cmlp_forward.1} parent=47 // loop_exit
                _
            $region48: #{cmlp_forward.1} parent=39 // pred_fallthru
              _
          $region40: #{cmlp_forward.1} parent=35 // pred_fallthru
            _
          %296 = vnop
        $region36: #{cmlp_forward.1} parent=31 // pred_fallthru
          _
      $region32: #{cmlp_forward.1} parent=5 // pred_fallthru
        _
      %p297 = scmp.le.s32.totalorder 1, %s11
      %p298 = scmp.lt.s32.totalorder %s11, 5
      %p299 = pnand %p297, %p298
      %p300 = pneg %p299
      // Predicated region
      $region71: #{cmlp_forward.1} parent=5 // pred_check
        _
      $region72: #{cmlp_forward.1} parent=5 // pred_check_branch
        %302 = sbr.rel (%p299) target = $region74
      $region73: #{cmlp_forward.1} parent=5 // pred_region
        %s303 = ssub.s32 %s11, 1
        %s304 = sand.u32 %s38, 1
        %s305 = sand.u32 %s38, 1
        %s306 = smul.addr %s305, 128
        %s307 = scalar_lea.vmem [#allocation2], %s306
        // Predicated region
        $region75: #{cmlp_forward.1} parent=73 // pred_check
          %p308 = pneg %p51
        $region76: #{cmlp_forward.1} parent=73 // pred_check_branch
          %310 = sbr.rel (%p308) target = $region78
        $region77: #{cmlp_forward.1} parent=73 // pred_region
          _
        $region78: #{cmlp_forward.1} parent=73 // pred_fallthru
          _
        %s311 = sand.u32 %s38, 1
        %s312 = sand.u32 %s38, 1
        %s313 = smul.addr %s312, 128
        %s314 = scalar_lea.vmem [#allocation2], %s313
        %p315 = pneg %p51
        %p316 = pneg %p48
        %p317 = pneg %p72
        %p318 = pneg %p69
        %p319 = pneg %p93
        %p320 = pneg %p90
        %p321 = pneg %p114
        %p322 = pneg %p111
        %p323 = pneg %p135
        %p324 = pneg %p132
        %p325 = pneg %p163
        %p326 = pneg %p160
        %s327 = sand.u32 %s150, 1
        %s328 = sand.u32 %s150, 1
        %s329 = smul.addr %s328, 128
        %s330 = scalar_lea.vmem [#allocation3], %s329
        %v332 = vld [vmem:[%s307] sm:$0xff]
        %v333 = vld [vmem:[%s307 + $0x8] sm:$0xff]
        %v334 = vld [vmem:[%s307 + $0x10] sm:$0xff]
        %v335 = vld [vmem:[%s307 + $0x18] sm:$0xff]
        %v336 = vld [vmem:[%s307 + $0x20] sm:$0xff]
        %v337 = vld [vmem:[%s307 + $0x28] sm:$0xff]
        %v338 = vld [vmem:[%s307 + $0x30] sm:$0xff]
        %v339 = vld [vmem:[%s307 + $0x38] sm:$0xff]
        %v340 = vld [vmem:[%s307 + $0x40] sm:$0xff]
        %v341 = vld [vmem:[%s307 + $0x48] sm:$0xff]
        %v342 = vld [vmem:[%s307 + $0x50] sm:$0xff]
        %v343 = vld [vmem:[%s307 + $0x58] sm:$0xff]
        %v344 = vld [vmem:[%s307 + $0x60] sm:$0xff]
        %v345 = vld [vmem:[%s307 + $0x68] sm:$0xff]
        %v346 = vld [vmem:[%s307 + $0x70] sm:$0xff]
        %v347 = vld [vmem:[%s307 + $0x78] sm:$0xff]
        %v348 = vpack.c.bf16 %v333, %v332
        %v349 = vpack.c.bf16 %v335, %v334
        %v350 = vpack.c.bf16 %v337, %v336
        %v351 = vpack.c.bf16 %v339, %v338
        %v352 = vpack.c.bf16 %v341, %v340
        %v353 = vpack.c.bf16 %v343, %v342
        %v354 = vpack.c.bf16 %v345, %v344
        %v355 = vpack.c.bf16 %v347, %v346
        %v356 = vld [vmem:[%s1] sm:$0xf]
        %v357 = vld [vmem:[%s1 + $0x4] sm:$0xf]
        %v358 = vld [vmem:[%s1 + $0x8] sm:$0xf]
        %v359 = vld [vmem:[%s1 + $0xc] sm:$0xf]
        %v360 = vld [vmem:[%s1 + $0x10] sm:$0xf]
        %v361 = vld [vmem:[%s1 + $0x14] sm:$0xf]
        %v362 = vld [vmem:[%s1 + $0x18] sm:$0xf]
        %v363 = vld [vmem:[%s1 + $0x1c] sm:$0xf]
        %v364 = vld [vmem:[%s1 + $0x20] sm:$0xf]
        %v365 = vld [vmem:[%s1 + $0x24] sm:$0xf]
        %v366 = vld [vmem:[%s1 + $0x28] sm:$0xf]
        %v367 = vld [vmem:[%s1 + $0x2c] sm:$0xf]
        %v368 = vld [vmem:[%s1 + $0x30] sm:$0xf]
        %v369 = vld [vmem:[%s1 + $0x34] sm:$0xf]
        %v370 = vld [vmem:[%s1 + $0x38] sm:$0xf]
        %v371 = vld [vmem:[%s1 + $0x3c] sm:$0xf]
        %v372 = vld [vmem:[%s1 + $0x40] sm:$0xf]
        %v373 = vld [vmem:[%s1 + $0x44] sm:$0xf]
        %v374 = vld [vmem:[%s1 + $0x48] sm:$0xf]
        %v375 = vld [vmem:[%s1 + $0x4c] sm:$0xf]
        %v376 = vld [vmem:[%s1 + $0x50] sm:$0xf]
        %v377 = vld [vmem:[%s1 + $0x54] sm:$0xf]
        %v378 = vld [vmem:[%s1 + $0x58] sm:$0xf]
        %v379 = vld [vmem:[%s1 + $0x5c] sm:$0xf]
        %v380 = vld [vmem:[%s1 + $0x60] sm:$0xf]
        %v381 = vld [vmem:[%s1 + $0x64] sm:$0xf]
        %v382 = vld [vmem:[%s1 + $0x68] sm:$0xf]
        %v383 = vld [vmem:[%s1 + $0x6c] sm:$0xf]
        %v384 = vld [vmem:[%s1 + $0x70] sm:$0xf]
        %v385 = vld [vmem:[%s1 + $0x74] sm:$0xf]
        %v386 = vld [vmem:[%s1 + $0x78] sm:$0xf]
        %v387 = vld [vmem:[%s1 + $0x7c] sm:$0xf]
        %v388 = vld [vmem:[%s1 + $0x80] sm:$0xf]
        %v389 = vld [vmem:[%s1 + $0x84] sm:$0xf]
        %v390 = vld [vmem:[%s1 + $0x88] sm:$0xf]
        %v391 = vld [vmem:[%s1 + $0x8c] sm:$0xf]
        %v392 = vld [vmem:[%s1 + $0x90] sm:$0xf]
        %v393 = vld [vmem:[%s1 + $0x94] sm:$0xf]
        %v394 = vld [vmem:[%s1 + $0x98] sm:$0xf]
        %v395 = vld [vmem:[%s1 + $0x9c] sm:$0xf]
        %v396 = vld [vmem:[%s1 + $0xa0] sm:$0xf]
        %v397 = vld [vmem:[%s1 + $0xa4] sm:$0xf]
        %v398 = vld [vmem:[%s1 + $0xa8] sm:$0xf]
        %v399 = vld [vmem:[%s1 + $0xac] sm:$0xf]
        %v400 = vld [vmem:[%s1 + $0xb0] sm:$0xf]
        %v401 = vld [vmem:[%s1 + $0xb4] sm:$0xf]
        %v402 = vld [vmem:[%s1 + $0xb8] sm:$0xf]
        %v403 = vld [vmem:[%s1 + $0xbc] sm:$0xf]
        %v404 = vld [vmem:[%s1 + $0xc0] sm:$0xf]
        %v405 = vld [vmem:[%s1 + $0xc4] sm:$0xf]
        %v406 = vld [vmem:[%s1 + $0xc8] sm:$0xf]
        %v407 = vld [vmem:[%s1 + $0xcc] sm:$0xf]
        %v408 = vld [vmem:[%s1 + $0xd0] sm:$0xf]
        %v409 = vld [vmem:[%s1 + $0xd4] sm:$0xf]
        %v410 = vld [vmem:[%s1 + $0xd8] sm:$0xf]
        %v411 = vld [vmem:[%s1 + $0xdc] sm:$0xf]
        %v412 = vld [vmem:[%s1 + $0xe0] sm:$0xf]
        %v413 = vld [vmem:[%s1 + $0xe4] sm:$0xf]
        %v414 = vld [vmem:[%s1 + $0xe8] sm:$0xf]
        %v415 = vld [vmem:[%s1 + $0xec] sm:$0xf]
        %v416 = vld [vmem:[%s1 + $0xf0] sm:$0xf]
        %v417 = vld [vmem:[%s1 + $0xf4] sm:$0xf]
        %v418 = vld [vmem:[%s1 + $0xf8] sm:$0xf]
        %v419 = vld [vmem:[%s1 + $0xfc] sm:$0xf]
        %v420 = vld [vmem:[%s2] sm:$0xff]
        %v421 = vld [vmem:[%s2 + $0x8] sm:$0xff]
        %v422 = vld [vmem:[%s2 + $0x10] sm:$0xff]
        %v423 = vld [vmem:[%s2 + $0x18] sm:$0xff]
        %v424 = vld [vmem:[%s2 + $0x20] sm:$0xff]
        %v425 = vld [vmem:[%s2 + $0x28] sm:$0xff]
        %v426 = vld [vmem:[%s2 + $0x30] sm:$0xff]
        %v427 = vld [vmem:[%s2 + $0x38] sm:$0xff]
        %v428 = vld [vmem:[%s2 + $0x40] sm:$0xff]
        %v429 = vld [vmem:[%s2 + $0x48] sm:$0xff]
        %v430 = vld [vmem:[%s2 + $0x50] sm:$0xff]
        %v431 = vld [vmem:[%s2 + $0x58] sm:$0xff]
        %v432 = vld [vmem:[%s2 + $0x60] sm:$0xff]
        %v433 = vld [vmem:[%s2 + $0x68] sm:$0xff]
        %v434 = vld [vmem:[%s2 + $0x70] sm:$0xff]
        %v435 = vld [vmem:[%s2 + $0x78] sm:$0xff]
        %v436 = vld [vmem:[%s2 + $0x80] sm:$0xff]
        %v437 = vld [vmem:[%s2 + $0x88] sm:$0xff]
        %v438 = vld [vmem:[%s2 + $0x90] sm:$0xff]
        %v439 = vld [vmem:[%s2 + $0x98] sm:$0xff]
        %v440 = vld [vmem:[%s2 + $0xa0] sm:$0xff]
        %v441 = vld [vmem:[%s2 + $0xa8] sm:$0xff]
        %v442 = vld [vmem:[%s2 + $0xb0] sm:$0xff]
        %v443 = vld [vmem:[%s2 + $0xb8] sm:$0xff]
        %v444 = vld [vmem:[%s2 + $0xc0] sm:$0xff]
        %v445 = vld [vmem:[%s2 + $0xc8] sm:$0xff]
        %v446 = vld [vmem:[%s2 + $0xd0] sm:$0xff]
        %v447 = vld [vmem:[%s2 + $0xd8] sm:$0xff]
        %v448 = vld [vmem:[%s2 + $0xe0] sm:$0xff]
        %v449 = vld [vmem:[%s2 + $0xe8] sm:$0xff]
        %v450 = vld [vmem:[%s2 + $0xf0] sm:$0xff]
        %v451 = vld [vmem:[%s2 + $0xf8] sm:$0xff]
        %v452 = vld [vmem:[%s2 + $0x100] sm:$0xff]
        %v453 = vld [vmem:[%s2 + $0x108] sm:$0xff]
        %v454 = vld [vmem:[%s2 + $0x110] sm:$0xff]
        %v455 = vld [vmem:[%s2 + $0x118] sm:$0xff]
        %v456 = vld [vmem:[%s2 + $0x120] sm:$0xff]
        %v457 = vld [vmem:[%s2 + $0x128] sm:$0xff]
        %v458 = vld [vmem:[%s2 + $0x130] sm:$0xff]
        %v459 = vld [vmem:[%s2 + $0x138] sm:$0xff]
        %v460 = vld [vmem:[%s2 + $0x140] sm:$0xff]
        %v461 = vld [vmem:[%s2 + $0x148] sm:$0xff]
        %v462 = vld [vmem:[%s2 + $0x150] sm:$0xff]
        %v463 = vld [vmem:[%s2 + $0x158] sm:$0xff]
        %v464 = vld [vmem:[%s2 + $0x160] sm:$0xff]
        %v465 = vld [vmem:[%s2 + $0x168] sm:$0xff]
        %v466 = vld [vmem:[%s2 + $0x170] sm:$0xff]
        %v467 = vld [vmem:[%s2 + $0x178] sm:$0xff]
        %v468 = vld [vmem:[%s2 + $0x180] sm:$0xff]
        %v469 = vld [vmem:[%s2 + $0x188] sm:$0xff]
        %v470 = vld [vmem:[%s2 + $0x190] sm:$0xff]
        %v471 = vld [vmem:[%s2 + $0x198] sm:$0xff]
        %v472 = vld [vmem:[%s2 + $0x1a0] sm:$0xff]
        %v473 = vld [vmem:[%s2 + $0x1a8] sm:$0xff]
        %v474 = vld [vmem:[%s2 + $0x1b0] sm:$0xff]
        %v475 = vld [vmem:[%s2 + $0x1b8] sm:$0xff]
        %v476 = vld [vmem:[%s2 + $0x1c0] sm:$0xff]
        %v477 = vld [vmem:[%s2 + $0x1c8] sm:$0xff]
        %v478 = vld [vmem:[%s2 + $0x1d0] sm:$0xff]
        %v479 = vld [vmem:[%s2 + $0x1d8] sm:$0xff]
        %v480 = vld [vmem:[%s2 + $0x1e0] sm:$0xff]
        %v481 = vld [vmem:[%s2 + $0x1e8] sm:$0xff]
        %v482 = vld [vmem:[%s2 + $0x1f0] sm:$0xff]
        %v483 = vld [vmem:[%s2 + $0x1f8] sm:$0xff]
        %485 = vset.pattern.permute.xlu0 0
        %486 = vperm.xlu0 %485, %v420
        %v487 = vpop.permute.xlu0 %486
        %490 = vset.pattern.permute.xlu0 0
        %491 = vperm.xlu0 %490, %v421
        %v492 = vpop.permute.xlu0 %491
        %495 = vset.pattern.permute.xlu0 0
        %496 = vperm.xlu0 %495, %v422
        %v497 = vpop.permute.xlu0 %496
        %500 = vset.pattern.permute.xlu0 0
        %501 = vperm.xlu0 %500, %v423
        %v502 = vpop.permute.xlu0 %501
        %505 = vset.pattern.permute.xlu0 0
        %506 = vperm.xlu0 %505, %v424
        %v507 = vpop.permute.xlu0 %506
        %510 = vset.pattern.permute.xlu0 0
        %511 = vperm.xlu0 %510, %v425
        %v512 = vpop.permute.xlu0 %511
        %515 = vset.pattern.permute.xlu0 0
        %516 = vperm.xlu0 %515, %v426
        %v517 = vpop.permute.xlu0 %516
        %520 = vset.pattern.permute.xlu0 0
        %521 = vperm.xlu0 %520, %v427
        %v522 = vpop.permute.xlu0 %521
        %525 = vset.pattern.permute.xlu0 0
        %526 = vperm.xlu0 %525, %v428
        %v527 = vpop.permute.xlu0 %526
        %530 = vset.pattern.permute.xlu0 0
        %531 = vperm.xlu0 %530, %v429
        %v532 = vpop.permute.xlu0 %531
        %535 = vset.pattern.permute.xlu0 0
        %536 = vperm.xlu0 %535, %v430
        %v537 = vpop.permute.xlu0 %536
        %540 = vset.pattern.permute.xlu0 0
        %541 = vperm.xlu0 %540, %v431
        %v542 = vpop.permute.xlu0 %541
        %545 = vset.pattern.permute.xlu0 0
        %546 = vperm.xlu0 %545, %v432
        %v547 = vpop.permute.xlu0 %546
        %550 = vset.pattern.permute.xlu0 0
        %551 = vperm.xlu0 %550, %v433
        %v552 = vpop.permute.xlu0 %551
        %555 = vset.pattern.permute.xlu0 0
        %556 = vperm.xlu0 %555, %v434
        %v557 = vpop.permute.xlu0 %556
        %560 = vset.pattern.permute.xlu0 0
        %561 = vperm.xlu0 %560, %v435
        %v562 = vpop.permute.xlu0 %561
        %565 = vset.pattern.permute.xlu0 0
        %566 = vperm.xlu0 %565, %v436
        %v567 = vpop.permute.xlu0 %566
        %570 = vset.pattern.permute.xlu0 0
        %571 = vperm.xlu0 %570, %v437
        %v572 = vpop.permute.xlu0 %571
        %575 = vset.pattern.permute.xlu0 0
        %576 = vperm.xlu0 %575, %v438
        %v577 = vpop.permute.xlu0 %576
        %580 = vset.pattern.permute.xlu0 0
        %581 = vperm.xlu0 %580, %v439
        %v582 = vpop.permute.xlu0 %581
        %585 = vset.pattern.permute.xlu0 0
        %586 = vperm.xlu0 %585, %v440
        %v587 = vpop.permute.xlu0 %586
        %590 = vset.pattern.permute.xlu0 0
        %591 = vperm.xlu0 %590, %v441
        %v592 = vpop.permute.xlu0 %591
        %595 = vset.pattern.permute.xlu0 0
        %596 = vperm.xlu0 %595, %v442
        %v597 = vpop.permute.xlu0 %596
        %600 = vset.pattern.permute.xlu0 0
        %601 = vperm.xlu0 %600, %v443
        %v602 = vpop.permute.xlu0 %601
        %605 = vset.pattern.permute.xlu0 0
        %606 = vperm.xlu0 %605, %v444
        %v607 = vpop.permute.xlu0 %606
        %610 = vset.pattern.permute.xlu0 0
        %611 = vperm.xlu0 %610, %v445
        %v612 = vpop.permute.xlu0 %611
        %615 = vset.pattern.permute.xlu0 0
        %616 = vperm.xlu0 %615, %v446
        %v617 = vpop.permute.xlu0 %616
        %620 = vset.pattern.permute.xlu0 0
        %621 = vperm.xlu0 %620, %v447
        %v622 = vpop.permute.xlu0 %621
        %625 = vset.pattern.permute.xlu0 0
        %626 = vperm.xlu0 %625, %v448
        %v627 = vpop.permute.xlu0 %626
        %630 = vset.pattern.permute.xlu0 0
        %631 = vperm.xlu0 %630, %v449
        %v632 = vpop.permute.xlu0 %631
        %635 = vset.pattern.permute.xlu0 0
        %636 = vperm.xlu0 %635, %v450
        %v637 = vpop.permute.xlu0 %636
        %640 = vset.pattern.permute.xlu0 0
        %641 = vperm.xlu0 %640, %v451
        %v642 = vpop.permute.xlu0 %641
        %645 = vset.pattern.permute.xlu0 0
        %646 = vperm.xlu0 %645, %v452
        %v647 = vpop.permute.xlu0 %646
        %650 = vset.pattern.permute.xlu0 0
        %651 = vperm.xlu0 %650, %v453
        %v652 = vpop.permute.xlu0 %651
        %655 = vset.pattern.permute.xlu0 0
        %656 = vperm.xlu0 %655, %v454
        %v657 = vpop.permute.xlu0 %656
        %660 = vset.pattern.permute.xlu0 0
        %661 = vperm.xlu0 %660, %v455
        %v662 = vpop.permute.xlu0 %661
        %665 = vset.pattern.permute.xlu0 0
        %666 = vperm.xlu0 %665, %v456
        %v667 = vpop.permute.xlu0 %666
        %670 = vset.pattern.permute.xlu0 0
        %671 = vperm.xlu0 %670, %v457
        %v672 = vpop.permute.xlu0 %671
        %675 = vset.pattern.permute.xlu0 0
        %676 = vperm.xlu0 %675, %v458
        %v677 = vpop.permute.xlu0 %676
        %680 = vset.pattern.permute.xlu0 0
        %681 = vperm.xlu0 %680, %v459
        %v682 = vpop.permute.xlu0 %681
        %685 = vset.pattern.permute.xlu0 0
        %686 = vperm.xlu0 %685, %v460
        %v687 = vpop.permute.xlu0 %686
        %690 = vset.pattern.permute.xlu0 0
        %691 = vperm.xlu0 %690, %v461
        %v692 = vpop.permute.xlu0 %691
        %695 = vset.pattern.permute.xlu0 0
        %696 = vperm.xlu0 %695, %v462
        %v697 = vpop.permute.xlu0 %696
        %700 = vset.pattern.permute.xlu0 0
        %701 = vperm.xlu0 %700, %v463
        %v702 = vpop.permute.xlu0 %701
        %705 = vset.pattern.permute.xlu0 0
        %706 = vperm.xlu0 %705, %v464
        %v707 = vpop.permute.xlu0 %706
        %710 = vset.pattern.permute.xlu0 0
        %711 = vperm.xlu0 %710, %v465
        %v712 = vpop.permute.xlu0 %711
        %715 = vset.pattern.permute.xlu0 0
        %716 = vperm.xlu0 %715, %v466
        %v717 = vpop.permute.xlu0 %716
        %720 = vset.pattern.permute.xlu0 0
        %721 = vperm.xlu0 %720, %v467
        %v722 = vpop.permute.xlu0 %721
        %725 = vset.pattern.permute.xlu0 0
        %726 = vperm.xlu0 %725, %v468
        %v727 = vpop.permute.xlu0 %726
        %730 = vset.pattern.permute.xlu0 0
        %731 = vperm.xlu0 %730, %v469
        %v732 = vpop.permute.xlu0 %731
        %735 = vset.pattern.permute.xlu0 0
        %736 = vperm.xlu0 %735, %v470
        %v737 = vpop.permute.xlu0 %736
        %740 = vset.pattern.permute.xlu0 0
        %741 = vperm.xlu0 %740, %v471
        %v742 = vpop.permute.xlu0 %741
        %745 = vset.pattern.permute.xlu0 0
        %746 = vperm.xlu0 %745, %v472
        %v747 = vpop.permute.xlu0 %746
        %750 = vset.pattern.permute.xlu0 0
        %751 = vperm.xlu0 %750, %v473
        %v752 = vpop.permute.xlu0 %751
        %755 = vset.pattern.permute.xlu0 0
        %756 = vperm.xlu0 %755, %v474
        %v757 = vpop.permute.xlu0 %756
        %760 = vset.pattern.permute.xlu0 0
        %761 = vperm.xlu0 %760, %v475
        %v762 = vpop.permute.xlu0 %761
        %765 = vset.pattern.permute.xlu0 0
        %766 = vperm.xlu0 %765, %v476
        %v767 = vpop.permute.xlu0 %766
        %770 = vset.pattern.permute.xlu0 0
        %771 = vperm.xlu0 %770, %v477
        %v772 = vpop.permute.xlu0 %771
        %775 = vset.pattern.permute.xlu0 0
        %776 = vperm.xlu0 %775, %v478
        %v777 = vpop.permute.xlu0 %776
        %780 = vset.pattern.permute.xlu0 0
        %781 = vperm.xlu0 %780, %v479
        %v782 = vpop.permute.xlu0 %781
        %785 = vset.pattern.permute.xlu0 0
        %786 = vperm.xlu0 %785, %v480
        %v787 = vpop.permute.xlu0 %786
        %790 = vset.pattern.permute.xlu0 0
        %791 = vperm.xlu0 %790, %v481
        %v792 = vpop.permute.xlu0 %791
        %795 = vset.pattern.permute.xlu0 0
        %796 = vperm.xlu0 %795, %v482
        %v797 = vpop.permute.xlu0 %796
        %800 = vset.pattern.permute.xlu0 0
        %801 = vperm.xlu0 %800, %v483
        %v802 = vpop.permute.xlu0 %801
        %v868 = vunpack.c.l.b16 %v356
        %v869 = vunpack.c.l.b16 %v357
        %v870 = vunpack.c.l.b16 %v358
        %v871 = vunpack.c.l.b16 %v359
        %v872 = vunpack.c.l.b16 %v360
        %v873 = vunpack.c.l.b16 %v361
        %v874 = vunpack.c.l.b16 %v362
        %v875 = vunpack.c.l.b16 %v363
        %v876 = vunpack.c.l.b16 %v364
        %v877 = vunpack.c.l.b16 %v365
        %v878 = vunpack.c.l.b16 %v366
        %v879 = vunpack.c.l.b16 %v367
        %v880 = vunpack.c.l.b16 %v368
        %v881 = vunpack.c.l.b16 %v369
        %v882 = vunpack.c.l.b16 %v370
        %v883 = vunpack.c.l.b16 %v371
        %v884 = vunpack.c.l.b16 %v372
        %v885 = vunpack.c.l.b16 %v373
        %v886 = vunpack.c.l.b16 %v374
        %v887 = vunpack.c.l.b16 %v375
        %v888 = vunpack.c.l.b16 %v376
        %v889 = vunpack.c.l.b16 %v377
        %v890 = vunpack.c.l.b16 %v378
        %v891 = vunpack.c.l.b16 %v379
        %v892 = vunpack.c.l.b16 %v380
        %v893 = vunpack.c.l.b16 %v381
        %v894 = vunpack.c.l.b16 %v382
        %v895 = vunpack.c.l.b16 %v383
        %v896 = vunpack.c.l.b16 %v384
        %v897 = vunpack.c.l.b16 %v385
        %v898 = vunpack.c.l.b16 %v386
        %v899 = vunpack.c.l.b16 %v387
        %v900 = vunpack.c.l.b16 %v388
        %v901 = vunpack.c.l.b16 %v389
        %v902 = vunpack.c.l.b16 %v390
        %v903 = vunpack.c.l.b16 %v391
        %v904 = vunpack.c.l.b16 %v392
        %v905 = vunpack.c.l.b16 %v393
        %v906 = vunpack.c.l.b16 %v394
        %v907 = vunpack.c.l.b16 %v395
        %v908 = vunpack.c.l.b16 %v396
        %v909 = vunpack.c.l.b16 %v397
        %v910 = vunpack.c.l.b16 %v398
        %v911 = vunpack.c.l.b16 %v399
        %v912 = vunpack.c.l.b16 %v400
        %v913 = vunpack.c.l.b16 %v401
        %v914 = vunpack.c.l.b16 %v402
        %v915 = vunpack.c.l.b16 %v403
        %v916 = vunpack.c.l.b16 %v404
        %v917 = vunpack.c.l.b16 %v405
        %v918 = vunpack.c.l.b16 %v406
        %v919 = vunpack.c.l.b16 %v407
        %v920 = vunpack.c.l.b16 %v408
        %v921 = vunpack.c.l.b16 %v409
        %v922 = vunpack.c.l.b16 %v410
        %v923 = vunpack.c.l.b16 %v411
        %v924 = vunpack.c.l.b16 %v412
        %v925 = vunpack.c.l.b16 %v413
        %v926 = vunpack.c.l.b16 %v414
        %v927 = vunpack.c.l.b16 %v415
        %v928 = vunpack.c.l.b16 %v416
        %v929 = vunpack.c.l.b16 %v417
        %v930 = vunpack.c.l.b16 %v418
        %v931 = vunpack.c.l.b16 %v419
        %v932 = vpack.c.b16 %v869, %v868
        %v933 = vpack.c.b16 %v871, %v870
        %v934 = vpack.c.b16 %v873, %v872
        %v935 = vpack.c.b16 %v875, %v874
        %v936 = vpack.c.b16 %v877, %v876
        %v937 = vpack.c.b16 %v879, %v878
        %v938 = vpack.c.b16 %v881, %v880
        %v939 = vpack.c.b16 %v883, %v882
        %v940 = vpack.c.b16 %v885, %v884
        %v941 = vpack.c.b16 %v887, %v886
        %v942 = vpack.c.b16 %v889, %v888
        %v943 = vpack.c.b16 %v891, %v890
        %v944 = vpack.c.b16 %v893, %v892
        %v945 = vpack.c.b16 %v895, %v894
        %v946 = vpack.c.b16 %v897, %v896
        %v947 = vpack.c.b16 %v899, %v898
        %v948 = vpack.c.b16 %v901, %v900
        %v949 = vpack.c.b16 %v903, %v902
        %v950 = vpack.c.b16 %v905, %v904
        %v951 = vpack.c.b16 %v907, %v906
        %v952 = vpack.c.b16 %v909, %v908
        %v953 = vpack.c.b16 %v911, %v910
        %v954 = vpack.c.b16 %v913, %v912
        %v955 = vpack.c.b16 %v915, %v914
        %v956 = vpack.c.b16 %v917, %v916
        %v957 = vpack.c.b16 %v919, %v918
        %v958 = vpack.c.b16 %v921, %v920
        %v959 = vpack.c.b16 %v923, %v922
        %v960 = vpack.c.b16 %v925, %v924
        %v961 = vpack.c.b16 %v927, %v926
        %v962 = vpack.c.b16 %v929, %v928
        %v963 = vpack.c.b16 %v931, %v930
        %996 = vmatprep.subr.bf16.mxu0 0
        %997 = vmatpush1.bf16.msra.mxu0 %v348
        %998 = vmatprep.subr.bf16.mxu0 0
        %999 = vmatpush1.bf16.msra.mxu0 %v349
        %1000 = vmatprep.subr.bf16.mxu0 0
        %1001 = vmatpush1.bf16.msra.mxu0 %v350
        %1002 = vmatprep.subr.bf16.mxu0 0
        %1003 = vmatpush1.bf16.msra.mxu0 %v351
        %1004 = vmatprep.subr.bf16.mxu0 0
        %1005 = vmatpush1.bf16.msra.mxu0 %v352
        %1006 = vmatprep.subr.bf16.mxu0 0
        %1007 = vmatpush1.bf16.msra.mxu0 %v353
        %1008 = vmatprep.subr.bf16.mxu0 0
        %1009 = vmatpush1.bf16.msra.mxu0 %v354
        %1010 = vmatprep.subr.bf16.mxu0 0
        %1011 = vmatpush1.bf16.msra.mxu0 %v355
        %1012 = vmatprep.subr.bf16.mxu0 0
        %1013 = vmatpush1.bf16.msra.mxu0 0
        %1014 = vmatprep.subr.bf16.mxu0 0
        %1015 = vmatpush1.bf16.msra.mxu0 0
        %1016 = vmatprep.subr.bf16.mxu0 0
        %1017 = vmatpush1.bf16.msra.mxu0 0
        %1018 = vmatprep.subr.bf16.mxu0 0
        %1019 = vmatpush1.bf16.msra.mxu0 0
        %1020 = vmatprep.subr.bf16.mxu0 0
        %1021 = vmatpush1.bf16.msra.mxu0 0
        %1022 = vmatprep.subr.bf16.mxu0 0
        %1023 = vmatpush1.bf16.msra.mxu0 0
        %1024 = vmatprep.subr.bf16.mxu0 0
        %1025 = vmatpush1.bf16.msra.mxu0 0
        %1026 = vmatprep.subr.bf16.mxu0 0
        %1027 = vmatpush1.bf16.msra.mxu0 0
        %1028 = vmatprep.mubr.bf16.mxu0 0
        %1029 = vmatmul.mubr.bf16.gmra.mrb[0].mxu0 %v932
        %v1030 = vpop.f32.mrb[0].mxu0
        %v1031 = vadd.f32 %v487, %v1030
        %v1032 = vpop.f32.mrb[0].mxu0
        %v1033 = vpop.f32.mrb[0].mxu0
        %v1034 = vadd.f32 %v492, %v1033
        %v1035 = vpop.f32.mrb[0].mxu0
        %1036 = vmatprep.mubr.bf16.mxu0 0
        %1037 = vmatmul.mubr.bf16.gmra.mrb[0].mxu0 %v933
        %v1038 = vpop.f32.mrb[0].mxu0
        %v1039 = vadd.f32 %v497, %v1038
        %v1040 = vpop.f32.mrb[0].mxu0
        %v1041 = vpop.f32.mrb[0].mxu0
        %v1042 = vadd.f32 %v502, %v1041
        %v1043 = vpop.f32.mrb[0].mxu0
        %1044 = vmatprep.mubr.bf16.mxu0 0
        %1045 = vmatmul.mubr.bf16.gmra.mrb[0].mxu0 %v934
        %v1046 = vpop.f32.mrb[0].mxu0
        %v1047 = vadd.f32 %v507, %v1046
        %v1048 = vpop.f32.mrb[0].mxu0
        %v1049 = vpop.f32.mrb[0].mxu0
        %v1050 = vadd.f32 %v512, %v1049
        %v1051 = vpop.f32.mrb[0].mxu0
        %1052 = vmatprep.mubr.bf16.mxu0 0
        %1053 = vmatmul.mubr.bf16.gmra.mrb[0].mxu0 %v935
        %v1054 = vpop.f32.mrb[0].mxu0
        %v1055 = vadd.f32 %v517, %v1054
        %v1056 = vpop.f32.mrb[0].mxu0
        %v1057 = vpop.f32.mrb[0].mxu0
        %v1058 = vadd.f32 %v522, %v1057
        %v1059 = vpop.f32.mrb[0].mxu0
        %1060 = vmatprep.mubr.bf16.mxu0 0
        %1061 = vmatmul.mubr.bf16.gmra.mrb[0].mxu0 %v936
        %v1062 = vpop.f32.mrb[0].mxu0
        %v1063 = vadd.f32 %v527, %v1062
        %v1064 = vpop.f32.mrb[0].mxu0
        %v1065 = vpop.f32.mrb[0].mxu0
        %v1066 = vadd.f32 %v532, %v1065
        %v1067 = vpop.f32.mrb[0].mxu0
        %1068 = vmatprep.mubr.bf16.mxu0 0
        %1069 = vmatmul.mubr.bf16.gmra.mrb[0].mxu0 %v937
        %v1070 = vpop.f32.mrb[0].mxu0
        %v1071 = vadd.f32 %v537, %v1070
        %v1072 = vpop.f32.mrb[0].mxu0
        %v1073 = vpop.f32.mrb[0].mxu0
        %v1074 = vadd.f32 %v542, %v1073
        %v1075 = vpop.f32.mrb[0].mxu0
        %1076 = vmatprep.mubr.bf16.mxu0 0
        %1077 = vmatmul.mubr.bf16.gmra.mrb[0].mxu0 %v938
        %v1078 = vpop.f32.mrb[0].mxu0
        %v1079 = vadd.f32 %v547, %v1078
        %v1080 = vpop.f32.mrb[0].mxu0
        %v1081 = vpop.f32.mrb[0].mxu0
        %v1082 = vadd.f32 %v552, %v1081
        %v1083 = vpop.f32.mrb[0].mxu0
        %1084 = vmatprep.mubr.bf16.mxu0 0
        %1085 = vmatmul.mubr.bf16.gmra.mrb[0].mxu0 %v939
        %v1086 = vpop.f32.mrb[0].mxu0
        %v1087 = vadd.f32 %v557, %v1086
        %v1088 = vpop.f32.mrb[0].mxu0
        %v1089 = vpop.f32.mrb[0].mxu0
        %v1090 = vadd.f32 %v562, %v1089
        %v1091 = vpop.f32.mrb[0].mxu0
        %1092 = vmatprep.mubr.bf16.mxu0 0
        %1093 = vmatmul.mubr.bf16.gmra.mrb[0].mxu0 %v940
        %v1094 = vpop.f32.mrb[0].mxu0
        %v1095 = vadd.f32 %v567, %v1094
        %v1096 = vpop.f32.mrb[0].mxu0
        %v1097 = vpop.f32.mrb[0].mxu0
        %v1098 = vadd.f32 %v572, %v1097
        %v1099 = vpop.f32.mrb[0].mxu0
        %1100 = vmatprep.mubr.bf16.mxu0 0
        %1101 = vmatmul.mubr.bf16.gmra.mrb[0].mxu0 %v941
        %v1102 = vpop.f32.mrb[0].mxu0
        %v1103 = vadd.f32 %v577, %v1102
        %v1104 = vpop.f32.mrb[0].mxu0
        %v1105 = vpop.f32.mrb[0].mxu0
        %v1106 = vadd.f32 %v582, %v1105
        %v1107 = vpop.f32.mrb[0].mxu0
        %1108 = vmatprep.mubr.bf16.mxu0 0
        %1109 = vmatmul.mubr.bf16.gmra.mrb[0].mxu0 %v942
        %v1110 = vpop.f32.mrb[0].mxu0
        %v1111 = vadd.f32 %v587, %v1110
        %v1112 = vpop.f32.mrb[0].mxu0
        %v1113 = vpop.f32.mrb[0].mxu0
        %v1114 = vadd.f32 %v592, %v1113
        %v1115 = vpop.f32.mrb[0].mxu0
        %1116 = vmatprep.mubr.bf16.mxu0 0
        %1117 = vmatmul.mubr.bf16.gmra.mrb[0].mxu0 %v943
        %v1118 = vpop.f32.mrb[0].mxu0
        %v1119 = vadd.f32 %v597, %v1118
        %v1120 = vpop.f32.mrb[0].mxu0
        %v1121 = vpop.f32.mrb[0].mxu0
        %v1122 = vadd.f32 %v602, %v1121
        %v1123 = vpop.f32.mrb[0].mxu0
        %1124 = vmatprep.mubr.bf16.mxu0 0
        %1125 = vmatmul.mubr.bf16.gmra.mrb[0].mxu0 %v944
        %v1126 = vpop.f32.mrb[0].mxu0
        %v1127 = vadd.f32 %v607, %v1126
        %v1128 = vpop.f32.mrb[0].mxu0
        %v1129 = vpop.f32.mrb[0].mxu0
        %v1130 = vadd.f32 %v612, %v1129
        %v1131 = vpop.f32.mrb[0].mxu0
        %1132 = vmatprep.mubr.bf16.mxu0 0
        %1133 = vmatmul.mubr.bf16.gmra.mrb[0].mxu0 %v945
        %v1134 = vpop.f32.mrb[0].mxu0
        %v1135 = vadd.f32 %v617, %v1134
        %v1136 = vpop.f32.mrb[0].mxu0
        %v1137 = vpop.f32.mrb[0].mxu0
        %v1138 = vadd.f32 %v622, %v1137
        %v1139 = vpop.f32.mrb[0].mxu0
        %1140 = vmatprep.mubr.bf16.mxu0 0
        %1141 = vmatmul.mubr.bf16.gmra.mrb[0].mxu0 %v946
        %v1142 = vpop.f32.mrb[0].mxu0
        %v1143 = vadd.f32 %v627, %v1142
        %v1144 = vpop.f32.mrb[0].mxu0
        %v1145 = vpop.f32.mrb[0].mxu0
        %v1146 = vadd.f32 %v632, %v1145
        %v1147 = vpop.f32.mrb[0].mxu0
        %1148 = vmatprep.mubr.bf16.mxu0 0
        %1149 = vmatmul.mubr.bf16.gmra.mrb[0].mxu0 %v947
        %v1150 = vpop.f32.mrb[0].mxu0
        %v1151 = vadd.f32 %v637, %v1150
        %v1152 = vpop.f32.mrb[0].mxu0
        %v1153 = vpop.f32.mrb[0].mxu0
        %v1154 = vadd.f32 %v642, %v1153
        %v1155 = vpop.f32.mrb[0].mxu0
        %1156 = vmatprep.mubr.bf16.mxu0 0
        %1157 = vmatmul.mubr.bf16.gmra.mrb[0].mxu0 %v948
        %v1158 = vpop.f32.mrb[0].mxu0
        %v1159 = vadd.f32 %v647, %v1158
        %v1160 = vpop.f32.mrb[0].mxu0
        %v1161 = vpop.f32.mrb[0].mxu0
        %v1162 = vadd.f32 %v652, %v1161
        %v1163 = vpop.f32.mrb[0].mxu0
        %1164 = vmatprep.mubr.bf16.mxu0 0
        %1165 = vmatmul.mubr.bf16.gmra.mrb[0].mxu0 %v949
        %v1166 = vpop.f32.mrb[0].mxu0
        %v1167 = vadd.f32 %v657, %v1166
        %v1168 = vpop.f32.mrb[0].mxu0
        %v1169 = vpop.f32.mrb[0].mxu0
        %v1170 = vadd.f32 %v662, %v1169
        %v1171 = vpop.f32.mrb[0].mxu0
        %1172 = vmatprep.mubr.bf16.mxu0 0
        %1173 = vmatmul.mubr.bf16.gmra.mrb[0].mxu0 %v950
        %v1174 = vpop.f32.mrb[0].mxu0
        %v1175 = vadd.f32 %v667, %v1174
        %v1176 = vpop.f32.mrb[0].mxu0
        %v1177 = vpop.f32.mrb[0].mxu0
        %v1178 = vadd.f32 %v672, %v1177
        %v1179 = vpop.f32.mrb[0].mxu0
        %1180 = vmatprep.mubr.bf16.mxu0 0
        %1181 = vmatmul.mubr.bf16.gmra.mrb[0].mxu0 %v951
        %v1182 = vpop.f32.mrb[0].mxu0
        %v1183 = vadd.f32 %v677, %v1182
        %v1184 = vpop.f32.mrb[0].mxu0
        %v1185 = vpop.f32.mrb[0].mxu0
        %v1186 = vadd.f32 %v682, %v1185
        %v1187 = vpop.f32.mrb[0].mxu0
        %1188 = vmatprep.mubr.bf16.mxu0 0
        %1189 = vmatmul.mubr.bf16.gmra.mrb[0].mxu0 %v952
        %v1190 = vpop.f32.mrb[0].mxu0
        %v1191 = vadd.f32 %v687, %v1190
        %v1192 = vpop.f32.mrb[0].mxu0
        %v1193 = vpop.f32.mrb[0].mxu0
        %v1194 = vadd.f32 %v692, %v1193
        %v1195 = vpop.f32.mrb[0].mxu0
        %1196 = vmatprep.mubr.bf16.mxu0 0
        %1197 = vmatmul.mubr.bf16.gmra.mrb[0].mxu0 %v953
        %v1198 = vpop.f32.mrb[0].mxu0
        %v1199 = vadd.f32 %v697, %v1198
        %v1200 = vpop.f32.mrb[0].mxu0
        %v1201 = vpop.f32.mrb[0].mxu0
        %v1202 = vadd.f32 %v702, %v1201
        %v1203 = vpop.f32.mrb[0].mxu0
        %1204 = vmatprep.mubr.bf16.mxu0 0
        %1205 = vmatmul.mubr.bf16.gmra.mrb[0].mxu0 %v954
        %v1206 = vpop.f32.mrb[0].mxu0
        %v1207 = vadd.f32 %v707, %v1206
        %v1208 = vpop.f32.mrb[0].mxu0
        %v1209 = vpop.f32.mrb[0].mxu0
        %v1210 = vadd.f32 %v712, %v1209
        %v1211 = vpop.f32.mrb[0].mxu0
        %1212 = vmatprep.mubr.bf16.mxu0 0
        %1213 = vmatmul.mubr.bf16.gmra.mrb[0].mxu0 %v955
        %v1214 = vpop.f32.mrb[0].mxu0
        %v1215 = vadd.f32 %v717, %v1214
        %v1216 = vpop.f32.mrb[0].mxu0
        %v1217 = vpop.f32.mrb[0].mxu0
        %v1218 = vadd.f32 %v722, %v1217
        %v1219 = vpop.f32.mrb[0].mxu0
        %1220 = vmatprep.mubr.bf16.mxu0 0
        %1221 = vmatmul.mubr.bf16.gmra.mrb[0].mxu0 %v956
        %v1222 = vpop.f32.mrb[0].mxu0
        %v1223 = vadd.f32 %v727, %v1222
        %v1224 = vpop.f32.mrb[0].mxu0
        %v1225 = vpop.f32.mrb[0].mxu0
        %v1226 = vadd.f32 %v732, %v1225
        %v1227 = vpop.f32.mrb[0].mxu0
        %1228 = vmatprep.mubr.bf16.mxu0 0
        %1229 = vmatmul.mubr.bf16.gmra.mrb[0].mxu0 %v957
        %v1230 = vpop.f32.mrb[0].mxu0
        %v1231 = vadd.f32 %v737, %v1230
        %v1232 = vpop.f32.mrb[0].mxu0
        %v1233 = vpop.f32.mrb[0].mxu0
        %v1234 = vadd.f32 %v742, %v1233
        %v1235 = vpop.f32.mrb[0].mxu0
        %1236 = vmatprep.mubr.bf16.mxu0 0
        %1237 = vmatmul.mubr.bf16.gmra.mrb[0].mxu0 %v958
        %v1238 = vpop.f32.mrb[0].mxu0
        %v1239 = vadd.f32 %v747, %v1238
        %v1240 = vpop.f32.mrb[0].mxu0
        %v1241 = vpop.f32.mrb[0].mxu0
        %v1242 = vadd.f32 %v752, %v1241
        %v1243 = vpop.f32.mrb[0].mxu0
        %1244 = vmatprep.mubr.bf16.mxu0 0
        %1245 = vmatmul.mubr.bf16.gmra.mrb[0].mxu0 %v959
        %v1246 = vpop.f32.mrb[0].mxu0
        %v1247 = vadd.f32 %v757, %v1246
        %v1248 = vpop.f32.mrb[0].mxu0
        %v1249 = vpop.f32.mrb[0].mxu0
        %v1250 = vadd.f32 %v762, %v1249
        %v1251 = vpop.f32.mrb[0].mxu0
        %1252 = vmatprep.mubr.bf16.mxu0 0
        %1253 = vmatmul.mubr.bf16.gmra.mrb[0].mxu0 %v960
        %v1254 = vpop.f32.mrb[0].mxu0
        %v1255 = vadd.f32 %v767, %v1254
        %v1256 = vpop.f32.mrb[0].mxu0
        %v1257 = vpop.f32.mrb[0].mxu0
        %v1258 = vadd.f32 %v772, %v1257
        %v1259 = vpop.f32.mrb[0].mxu0
        %1260 = vmatprep.mubr.bf16.mxu0 0
        %1261 = vmatmul.mubr.bf16.gmra.mrb[0].mxu0 %v961
        %v1262 = vpop.f32.mrb[0].mxu0
        %v1263 = vadd.f32 %v777, %v1262
        %v1264 = vpop.f32.mrb[0].mxu0
        %v1265 = vpop.f32.mrb[0].mxu0
        %v1266 = vadd.f32 %v782, %v1265
        %v1267 = vpop.f32.mrb[0].mxu0
        %1268 = vmatprep.mubr.bf16.mxu0 0
        %1269 = vmatmul.mubr.bf16.gmra.mrb[0].mxu0 %v962
        %v1270 = vpop.f32.mrb[0].mxu0
        %v1271 = vadd.f32 %v787, %v1270
        %v1272 = vpop.f32.mrb[0].mxu0
        %v1273 = vpop.f32.mrb[0].mxu0
        %v1274 = vadd.f32 %v792, %v1273
        %v1275 = vpop.f32.mrb[0].mxu0
        %1276 = vmatprep.mubr.bf16.mxu0 0
        %1277 = vmatmul.mubr.bf16.gmra.mrb[0].mxu0 %v963
        %v1278 = vpop.f32.mrb[0].mxu0
        %v1279 = vadd.f32 %v797, %v1278
        %v1280 = vpop.f32.mrb[0].mxu0
        %v1281 = vpop.f32.mrb[0].mxu0
        %v1282 = vadd.f32 %v802, %v1281
        %v1283 = vpop.f32.mrb[0].mxu0
        %1284 = vdwg.mxu0
        %v1285 = vmul.f32 %v1031, 0.5
        %v1286 = vmul.f32 %v1034, 0.5
        %v1287 = vmul.f32 %v1039, 0.5
        %v1288 = vmul.f32 %v1042, 0.5
        %v1289 = vmul.f32 %v1047, 0.5
        %v1290 = vmul.f32 %v1050, 0.5
        %v1291 = vmul.f32 %v1055, 0.5
        %v1292 = vmul.f32 %v1058, 0.5
        %v1293 = vmul.f32 %v1063, 0.5
        %v1294 = vmul.f32 %v1066, 0.5
        %v1295 = vmul.f32 %v1071, 0.5
        %v1296 = vmul.f32 %v1074, 0.5
        %v1297 = vmul.f32 %v1079, 0.5
        %v1298 = vmul.f32 %v1082, 0.5
        %v1299 = vmul.f32 %v1087, 0.5
        %v1300 = vmul.f32 %v1090, 0.5
        %v1301 = vmul.f32 %v1095, 0.5
        %v1302 = vmul.f32 %v1098, 0.5
        %v1303 = vmul.f32 %v1103, 0.5
        %v1304 = vmul.f32 %v1106, 0.5
        %v1305 = vmul.f32 %v1111, 0.5
        %v1306 = vmul.f32 %v1114, 0.5
        %v1307 = vmul.f32 %v1119, 0.5
        %v1308 = vmul.f32 %v1122, 0.5
        %v1309 = vmul.f32 %v1127, 0.5
        %v1310 = vmul.f32 %v1130, 0.5
        %v1311 = vmul.f32 %v1135, 0.5
        %v1312 = vmul.f32 %v1138, 0.5
        %v1313 = vmul.f32 %v1143, 0.5
        %v1314 = vmul.f32 %v1146, 0.5
        %v1315 = vmul.f32 %v1151, 0.5
        %v1316 = vmul.f32 %v1154, 0.5
        %v1317 = vmul.f32 %v1159, 0.5
        %v1318 = vmul.f32 %v1162, 0.5
        %v1319 = vmul.f32 %v1167, 0.5
        %v1320 = vmul.f32 %v1170, 0.5
        %v1321 = vmul.f32 %v1175, 0.5
        %v1322 = vmul.f32 %v1178, 0.5
        %v1323 = vmul.f32 %v1183, 0.5
        %v1324 = vmul.f32 %v1186, 0.5
        %v1325 = vmul.f32 %v1191, 0.5
        %v1326 = vmul.f32 %v1194, 0.5
        %v1327 = vmul.f32 %v1199, 0.5
        %v1328 = vmul.f32 %v1202, 0.5
        %v1329 = vmul.f32 %v1207, 0.5
        %v1330 = vmul.f32 %v1210, 0.5
        %v1331 = vmul.f32 %v1215, 0.5
        %v1332 = vmul.f32 %v1218, 0.5
        %v1333 = vmul.f32 %v1223, 0.5
        %v1334 = vmul.f32 %v1226, 0.5
        %v1335 = vmul.f32 %v1231, 0.5
        %v1336 = vmul.f32 %v1234, 0.5
        %v1337 = vmul.f32 %v1239, 0.5
        %v1338 = vmul.f32 %v1242, 0.5
        %v1339 = vmul.f32 %v1247, 0.5
        %v1340 = vmul.f32 %v1250, 0.5
        %v1341 = vmul.f32 %v1255, 0.5
        %v1342 = vmul.f32 %v1258, 0.5
        %v1343 = vmul.f32 %v1263, 0.5
        %v1344 = vmul.f32 %v1266, 0.5
        %v1345 = vmul.f32 %v1271, 0.5
        %v1346 = vmul.f32 %v1274, 0.5
        %v1347 = vmul.f32 %v1279, 0.5
        %v1348 = vmul.f32 %v1282, 0.5
        %v1349 = vmul.f32 %v1031, 0.70710677
        %v1350 = vmul.f32 %v1034, 0.70710677
        %v1351 = vmul.f32 %v1039, 0.70710677
        %v1352 = vmul.f32 %v1042, 0.70710677
        %v1353 = vmul.f32 %v1047, 0.70710677
        %v1354 = vmul.f32 %v1050, 0.70710677
        %v1355 = vmul.f32 %v1055, 0.70710677
        %v1356 = vmul.f32 %v1058, 0.70710677
        %v1357 = vmul.f32 %v1063, 0.70710677
        %v1358 = vmul.f32 %v1066, 0.70710677
        %v1359 = vmul.f32 %v1071, 0.70710677
        %v1360 = vmul.f32 %v1074, 0.70710677
        %v1361 = vmul.f32 %v1079, 0.70710677
        %v1362 = vmul.f32 %v1082, 0.70710677
        %v1363 = vmul.f32 %v1087, 0.70710677
        %v1364 = vmul.f32 %v1090, 0.70710677
        %v1365 = vmul.f32 %v1095, 0.70710677
        %v1366 = vmul.f32 %v1098, 0.70710677
        %v1367 = vmul.f32 %v1103, 0.70710677
        %v1368 = vmul.f32 %v1106, 0.70710677
        %v1369 = vmul.f32 %v1111, 0.70710677
        %v1370 = vmul.f32 %v1114, 0.70710677
        %v1371 = vmul.f32 %v1119, 0.70710677
        %v1372 = vmul.f32 %v1122, 0.70710677
        %v1373 = vmul.f32 %v1127, 0.70710677
        %v1374 = vmul.f32 %v1130, 0.70710677
        %v1375 = vmul.f32 %v1135, 0.70710677
        %v1376 = vmul.f32 %v1138, 0.70710677
        %v1377 = vmul.f32 %v1143, 0.70710677
        %v1378 = vmul.f32 %v1146, 0.70710677
        %v1379 = vmul.f32 %v1151, 0.70710677
        %v1380 = vmul.f32 %v1154, 0.70710677
        %v1381 = vmul.f32 %v1159, 0.70710677
        %v1382 = vmul.f32 %v1162, 0.70710677
        %v1383 = vmul.f32 %v1167, 0.70710677
        %v1384 = vmul.f32 %v1170, 0.70710677
        %v1385 = vmul.f32 %v1175, 0.70710677
        %v1386 = vmul.f32 %v1178, 0.70710677
        %v1387 = vmul.f32 %v1183, 0.70710677
        %v1388 = vmul.f32 %v1186, 0.70710677
        %v1389 = vmul.f32 %v1191, 0.70710677
        %v1390 = vmul.f32 %v1194, 0.70710677
        %v1391 = vmul.f32 %v1199, 0.70710677
        %v1392 = vmul.f32 %v1202, 0.70710677
        %v1393 = vmul.f32 %v1207, 0.70710677
        %v1394 = vmul.f32 %v1210, 0.70710677
        %v1395 = vmul.f32 %v1215, 0.70710677
        %v1396 = vmul.f32 %v1218, 0.70710677
        %v1397 = vmul.f32 %v1223, 0.70710677
        %v1398 = vmul.f32 %v1226, 0.70710677
        %v1399 = vmul.f32 %v1231, 0.70710677
        %v1400 = vmul.f32 %v1234, 0.70710677
        %v1401 = vmul.f32 %v1239, 0.70710677
        %v1402 = vmul.f32 %v1242, 0.70710677
        %v1403 = vmul.f32 %v1247, 0.70710677
        %v1404 = vmul.f32 %v1250, 0.70710677
        %v1405 = vmul.f32 %v1255, 0.70710677
        %v1406 = vmul.f32 %v1258, 0.70710677
        %v1407 = vmul.f32 %v1263, 0.70710677
        %v1408 = vmul.f32 %v1266, 0.70710677
        %v1409 = vmul.f32 %v1271, 0.70710677
        %v1410 = vmul.f32 %v1274, 0.70710677
        %v1411 = vmul.f32 %v1279, 0.70710677
        %v1412 = vmul.f32 %v1282, 0.70710677
        %v1413 = verf.f32.pop %v1349
        %v1414 = verf.f32.pop %v1350
        %v1415 = verf.f32.pop %v1351
        %v1416 = verf.f32.pop %v1352
        %v1417 = verf.f32.pop %v1353
        %v1418 = verf.f32.pop %v1354
        %v1419 = verf.f32.pop %v1355
        %v1420 = verf.f32.pop %v1356
        %v1421 = verf.f32.pop %v1357
        %v1422 = verf.f32.pop %v1358
        %v1423 = verf.f32.pop %v1359
        %v1424 = verf.f32.pop %v1360
        %v1425 = verf.f32.pop %v1361
        %v1426 = verf.f32.pop %v1362
        %v1427 = verf.f32.pop %v1363
        %v1428 = verf.f32.pop %v1364
        %v1429 = verf.f32.pop %v1365
        %v1430 = verf.f32.pop %v1366
        %v1431 = verf.f32.pop %v1367
        %v1432 = verf.f32.pop %v1368
        %v1433 = verf.f32.pop %v1369
        %v1434 = verf.f32.pop %v1370
        %v1435 = verf.f32.pop %v1371
        %v1436 = verf.f32.pop %v1372
        %v1437 = verf.f32.pop %v1373
        %v1438 = verf.f32.pop %v1374
        %v1439 = verf.f32.pop %v1375
        %v1440 = verf.f32.pop %v1376
        %v1441 = verf.f32.pop %v1377
        %v1442 = verf.f32.pop %v1378
        %v1443 = verf.f32.pop %v1379
        %v1444 = verf.f32.pop %v1380
        %v1445 = verf.f32.pop %v1381
        %v1446 = verf.f32.pop %v1382
        %v1447 = verf.f32.pop %v1383
        %v1448 = verf.f32.pop %v1384
        %v1449 = verf.f32.pop %v1385
        %v1450 = verf.f32.pop %v1386
        %v1451 = verf.f32.pop %v1387
        %v1452 = verf.f32.pop %v1388
        %v1453 = verf.f32.pop %v1389
        %v1454 = verf.f32.pop %v1390
        %v1455 = verf.f32.pop %v1391
        %v1456 = verf.f32.pop %v1392
        %v1457 = verf.f32.pop %v1393
        %v1458 = verf.f32.pop %v1394
        %v1459 = verf.f32.pop %v1395
        %v1460 = verf.f32.pop %v1396
        %v1461 = verf.f32.pop %v1397
        %v1462 = verf.f32.pop %v1398
        %v1463 = verf.f32.pop %v1399
        %v1464 = verf.f32.pop %v1400
        %v1465 = verf.f32.pop %v1401
        %v1466 = verf.f32.pop %v1402
        %v1467 = verf.f32.pop %v1403
        %v1468 = verf.f32.pop %v1404
        %v1469 = verf.f32.pop %v1405
        %v1470 = verf.f32.pop %v1406
        %v1471 = verf.f32.pop %v1407
        %v1472 = verf.f32.pop %v1408
        %v1473 = verf.f32.pop %v1409
        %v1474 = verf.f32.pop %v1410
        %v1475 = verf.f32.pop %v1411
        %v1476 = verf.f32.pop %v1412
        %v1477 = vadd.f32 %v1413, 1.0
        %v1478 = vadd.f32 %v1414, 1.0
        %v1479 = vadd.f32 %v1415, 1.0
        %v1480 = vadd.f32 %v1416, 1.0
        %v1481 = vadd.f32 %v1417, 1.0
        %v1482 = vadd.f32 %v1418, 1.0
        %v1483 = vadd.f32 %v1419, 1.0
        %v1484 = vadd.f32 %v1420, 1.0
        %v1485 = vadd.f32 %v1421, 1.0
        %v1486 = vadd.f32 %v1422, 1.0
        %v1487 = vadd.f32 %v1423, 1.0
        %v1488 = vadd.f32 %v1424, 1.0
        %v1489 = vadd.f32 %v1425, 1.0
        %v1490 = vadd.f32 %v1426, 1.0
        %v1491 = vadd.f32 %v1427, 1.0
        %v1492 = vadd.f32 %v1428, 1.0
        %v1493 = vadd.f32 %v1429, 1.0
        %v1494 = vadd.f32 %v1430, 1.0
        %v1495 = vadd.f32 %v1431, 1.0
        %v1496 = vadd.f32 %v1432, 1.0
        %v1497 = vadd.f32 %v1433, 1.0
        %v1498 = vadd.f32 %v1434, 1.0
        %v1499 = vadd.f32 %v1435, 1.0
        %v1500 = vadd.f32 %v1436, 1.0
        %v1501 = vadd.f32 %v1437, 1.0
        %v1502 = vadd.f32 %v1438, 1.0
        %v1503 = vadd.f32 %v1439, 1.0
        %v1504 = vadd.f32 %v1440, 1.0
        %v1505 = vadd.f32 %v1441, 1.0
        %v1506 = vadd.f32 %v1442, 1.0
        %v1507 = vadd.f32 %v1443, 1.0
        %v1508 = vadd.f32 %v1444, 1.0
        %v1509 = vadd.f32 %v1445, 1.0
        %v1510 = vadd.f32 %v1446, 1.0
        %v1511 = vadd.f32 %v1447, 1.0
        %v1512 = vadd.f32 %v1448, 1.0
        %v1513 = vadd.f32 %v1449, 1.0
        %v1514 = vadd.f32 %v1450, 1.0
        %v1515 = vadd.f32 %v1451, 1.0
        %v1516 = vadd.f32 %v1452, 1.0
        %v1517 = vadd.f32 %v1453, 1.0
        %v1518 = vadd.f32 %v1454, 1.0
        %v1519 = vadd.f32 %v1455, 1.0
        %v1520 = vadd.f32 %v1456, 1.0
        %v1521 = vadd.f32 %v1457, 1.0
        %v1522 = vadd.f32 %v1458, 1.0
        %v1523 = vadd.f32 %v1459, 1.0
        %v1524 = vadd.f32 %v1460, 1.0
        %v1525 = vadd.f32 %v1461, 1.0
        %v1526 = vadd.f32 %v1462, 1.0
        %v1527 = vadd.f32 %v1463, 1.0
        %v1528 = vadd.f32 %v1464, 1.0
        %v1529 = vadd.f32 %v1465, 1.0
        %v1530 = vadd.f32 %v1466, 1.0
        %v1531 = vadd.f32 %v1467, 1.0
        %v1532 = vadd.f32 %v1468, 1.0
        %v1533 = vadd.f32 %v1469, 1.0
        %v1534 = vadd.f32 %v1470, 1.0
        %v1535 = vadd.f32 %v1471, 1.0
        %v1536 = vadd.f32 %v1472, 1.0
        %v1537 = vadd.f32 %v1473, 1.0
        %v1538 = vadd.f32 %v1474, 1.0
        %v1539 = vadd.f32 %v1475, 1.0
        %v1540 = vadd.f32 %v1476, 1.0
        %v1541 = vmul.f32 %v1285, %v1477
        %v1542 = vmul.f32 %v1286, %v1478
        %v1543 = vmul.f32 %v1287, %v1479
        %v1544 = vmul.f32 %v1288, %v1480
        %v1545 = vmul.f32 %v1289, %v1481
        %v1546 = vmul.f32 %v1290, %v1482
        %v1547 = vmul.f32 %v1291, %v1483
        %v1548 = vmul.f32 %v1292, %v1484
        %v1549 = vmul.f32 %v1293, %v1485
        %v1550 = vmul.f32 %v1294, %v1486
        %v1551 = vmul.f32 %v1295, %v1487
        %v1552 = vmul.f32 %v1296, %v1488
        %v1553 = vmul.f32 %v1297, %v1489
        %v1554 = vmul.f32 %v1298, %v1490
        %v1555 = vmul.f32 %v1299, %v1491
        %v1556 = vmul.f32 %v1300, %v1492
        %v1557 = vmul.f32 %v1301, %v1493
        %v1558 = vmul.f32 %v1302, %v1494
        %v1559 = vmul.f32 %v1303, %v1495
        %v1560 = vmul.f32 %v1304, %v1496
        %v1561 = vmul.f32 %v1305, %v1497
        %v1562 = vmul.f32 %v1306, %v1498
        %v1563 = vmul.f32 %v1307, %v1499
        %v1564 = vmul.f32 %v1308, %v1500
        %v1565 = vmul.f32 %v1309, %v1501
        %v1566 = vmul.f32 %v1310, %v1502
        %v1567 = vmul.f32 %v1311, %v1503
        %v1568 = vmul.f32 %v1312, %v1504
        %v1569 = vmul.f32 %v1313, %v1505
        %v1570 = vmul.f32 %v1314, %v1506
        %v1571 = vmul.f32 %v1315, %v1507
        %v1572 = vmul.f32 %v1316, %v1508
        %v1573 = vmul.f32 %v1317, %v1509
        %v1574 = vmul.f32 %v1318, %v1510
        %v1575 = vmul.f32 %v1319, %v1511
        %v1576 = vmul.f32 %v1320, %v1512
        %v1577 = vmul.f32 %v1321, %v1513
        %v1578 = vmul.f32 %v1322, %v1514
        %v1579 = vmul.f32 %v1323, %v1515
        %v1580 = vmul.f32 %v1324, %v1516
        %v1581 = vmul.f32 %v1325, %v1517
        %v1582 = vmul.f32 %v1326, %v1518
        %v1583 = vmul.f32 %v1327, %v1519
        %v1584 = vmul.f32 %v1328, %v1520
        %v1585 = vmul.f32 %v1329, %v1521
        %v1586 = vmul.f32 %v1330, %v1522
        %v1587 = vmul.f32 %v1331, %v1523
        %v1588 = vmul.f32 %v1332, %v1524
        %v1589 = vmul.f32 %v1333, %v1525
        %v1590 = vmul.f32 %v1334, %v1526
        %v1591 = vmul.f32 %v1335, %v1527
        %v1592 = vmul.f32 %v1336, %v1528
        %v1593 = vmul.f32 %v1337, %v1529
        %v1594 = vmul.f32 %v1338, %v1530
        %v1595 = vmul.f32 %v1339, %v1531
        %v1596 = vmul.f32 %v1340, %v1532
        %v1597 = vmul.f32 %v1341, %v1533
        %v1598 = vmul.f32 %v1342, %v1534
        %v1599 = vmul.f32 %v1343, %v1535
        %v1600 = vmul.f32 %v1344, %v1536
        %v1601 = vmul.f32 %v1345, %v1537
        %v1602 = vmul.f32 %v1346, %v1538
        %v1603 = vmul.f32 %v1347, %v1539
        %v1604 = vmul.f32 %v1348, %v1540
        %v1605 = vld [vmem:[%s3] sm:$0xff]
        %v1606 = vld [vmem:[%s3 + $0x8] sm:$0xff]
        %v1607 = vld [vmem:[%s3 + $0x10] sm:$0xff]
        %v1608 = vld [vmem:[%s3 + $0x18] sm:$0xff]
        %v1609 = vld [vmem:[%s3 + $0x20] sm:$0xff]
        %v1610 = vld [vmem:[%s3 + $0x28] sm:$0xff]
        %v1611 = vld [vmem:[%s3 + $0x30] sm:$0xff]
        %v1612 = vld [vmem:[%s3 + $0x38] sm:$0xff]
        %v1613 = vld [vmem:[%s3 + $0x40] sm:$0xff]
        %v1614 = vld [vmem:[%s3 + $0x48] sm:$0xff]
        %v1615 = vld [vmem:[%s3 + $0x50] sm:$0xff]
        %v1616 = vld [vmem:[%s3 + $0x58] sm:$0xff]
        %v1617 = vld [vmem:[%s3 + $0x60] sm:$0xff]
        %v1618 = vld [vmem:[%s3 + $0x68] sm:$0xff]
        %v1619 = vld [vmem:[%s3 + $0x70] sm:$0xff]
        %v1620 = vld [vmem:[%s3 + $0x78] sm:$0xff]
        %v1621 = vld [vmem:[%s3 + $0x80] sm:$0xff]
        %v1622 = vld [vmem:[%s3 + $0x88] sm:$0xff]
        %v1623 = vld [vmem:[%s3 + $0x90] sm:$0xff]
        %v1624 = vld [vmem:[%s3 + $0x98] sm:$0xff]
        %v1625 = vld [vmem:[%s3 + $0xa0] sm:$0xff]
        %v1626 = vld [vmem:[%s3 + $0xa8] sm:$0xff]
        %v1627 = vld [vmem:[%s3 + $0xb0] sm:$0xff]
        %v1628 = vld [vmem:[%s3 + $0xb8] sm:$0xff]
        %v1629 = vld [vmem:[%s3 + $0xc0] sm:$0xff]
        %v1630 = vld [vmem:[%s3 + $0xc8] sm:$0xff]
        %v1631 = vld [vmem:[%s3 + $0xd0] sm:$0xff]
        %v1632 = vld [vmem:[%s3 + $0xd8] sm:$0xff]
        %v1633 = vld [vmem:[%s3 + $0xe0] sm:$0xff]
        %v1634 = vld [vmem:[%s3 + $0xe8] sm:$0xff]
        %v1635 = vld [vmem:[%s3 + $0xf0] sm:$0xff]
        %v1636 = vld [vmem:[%s3 + $0xf8] sm:$0xff]
        %v1637 = vpack.c.bf16 %v1542, %v1541
        %v1638 = vpack.c.bf16 %v1544, %v1543
        %v1639 = vpack.c.bf16 %v1546, %v1545
        %v1640 = vpack.c.bf16 %v1548, %v1547
        %v1641 = vpack.c.bf16 %v1550, %v1549
        %v1642 = vpack.c.bf16 %v1552, %v1551
        %v1643 = vpack.c.bf16 %v1554, %v1553
        %v1644 = vpack.c.bf16 %v1556, %v1555
        %v1645 = vpack.c.bf16 %v1558, %v1557
        %v1646 = vpack.c.bf16 %v1560, %v1559
        %v1647 = vpack.c.bf16 %v1562, %v1561
        %v1648 = vpack.c.bf16 %v1564, %v1563
        %v1649 = vpack.c.bf16 %v1566, %v1565
        %v1650 = vpack.c.bf16 %v1568, %v1567
        %v1651 = vpack.c.bf16 %v1570, %v1569
        %v1652 = vpack.c.bf16 %v1572, %v1571
        %v1653 = vpack.c.bf16 %v1574, %v1573
        %v1654 = vpack.c.bf16 %v1576, %v1575
        %v1655 = vpack.c.bf16 %v1578, %v1577
        %v1656 = vpack.c.bf16 %v1580, %v1579
        %v1657 = vpack.c.bf16 %v1582, %v1581
        %v1658 = vpack.c.bf16 %v1584, %v1583
        %v1659 = vpack.c.bf16 %v1586, %v1585
        %v1660 = vpack.c.bf16 %v1588, %v1587
        %v1661 = vpack.c.bf16 %v1590, %v1589
        %v1662 = vpack.c.bf16 %v1592, %v1591
        %v1663 = vpack.c.bf16 %v1594, %v1593
        %v1664 = vpack.c.bf16 %v1596, %v1595
        %v1665 = vpack.c.bf16 %v1598, %v1597
        %v1666 = vpack.c.bf16 %v1600, %v1599
        %v1667 = vpack.c.bf16 %v1602, %v1601
        %v1668 = vpack.c.bf16 %v1604, %v1603
        %v1669 = vld [vmem:[%s4] sm:$0xff]
        %v1670 = vld [vmem:[%s4 + $0x8] sm:$0xff]
        %v1671 = vld [vmem:[%s4 + $0x10] sm:$0xff]
        %v1672 = vld [vmem:[%s4 + $0x18] sm:$0xff]
        %v1673 = vld [vmem:[%s4 + $0x20] sm:$0xff]
        %v1674 = vld [vmem:[%s4 + $0x28] sm:$0xff]
        %v1675 = vld [vmem:[%s4 + $0x30] sm:$0xff]
        %v1676 = vld [vmem:[%s4 + $0x38] sm:$0xff]
        %v1677 = vld [vmem:[%s4 + $0x40] sm:$0xff]
        %v1678 = vld [vmem:[%s4 + $0x48] sm:$0xff]
        %v1679 = vld [vmem:[%s4 + $0x50] sm:$0xff]
        %v1680 = vld [vmem:[%s4 + $0x58] sm:$0xff]
        %v1681 = vld [vmem:[%s4 + $0x60] sm:$0xff]
        %v1682 = vld [vmem:[%s4 + $0x68] sm:$0xff]
        %v1683 = vld [vmem:[%s4 + $0x70] sm:$0xff]
        %v1684 = vld [vmem:[%s4 + $0x78] sm:$0xff]
        %1686 = vset.pattern.permute.xlu0 0
        %1687 = vperm.xlu0 %1686, %v1669
        %v1688 = vpop.permute.xlu0 %1687
        %1691 = vset.pattern.permute.xlu0 0
        %1692 = vperm.xlu0 %1691, %v1670
        %v1693 = vpop.permute.xlu0 %1692
        %1696 = vset.pattern.permute.xlu0 0
        %1697 = vperm.xlu0 %1696, %v1671
        %v1698 = vpop.permute.xlu0 %1697
        %1701 = vset.pattern.permute.xlu0 0
        %1702 = vperm.xlu0 %1701, %v1672
        %v1703 = vpop.permute.xlu0 %1702
        %1706 = vset.pattern.permute.xlu0 0
        %1707 = vperm.xlu0 %1706, %v1673
        %v1708 = vpop.permute.xlu0 %1707
        %1711 = vset.pattern.permute.xlu0 0
        %1712 = vperm.xlu0 %1711, %v1674
        %v1713 = vpop.permute.xlu0 %1712
        %1716 = vset.pattern.permute.xlu0 0
        %1717 = vperm.xlu0 %1716, %v1675
        %v1718 = vpop.permute.xlu0 %1717
        %1721 = vset.pattern.permute.xlu0 0
        %1722 = vperm.xlu0 %1721, %v1676
        %v1723 = vpop.permute.xlu0 %1722
        %1726 = vset.pattern.permute.xlu0 0
        %1727 = vperm.xlu0 %1726, %v1677
        %v1728 = vpop.permute.xlu0 %1727
        %1731 = vset.pattern.permute.xlu0 0
        %1732 = vperm.xlu0 %1731, %v1678
        %v1733 = vpop.permute.xlu0 %1732
        %1736 = vset.pattern.permute.xlu0 0
        %1737 = vperm.xlu0 %1736, %v1679
        %v1738 = vpop.permute.xlu0 %1737
        %1741 = vset.pattern.permute.xlu0 0
        %1742 = vperm.xlu0 %1741, %v1680
        %v1743 = vpop.permute.xlu0 %1742
        %1746 = vset.pattern.permute.xlu0 0
        %1747 = vperm.xlu0 %1746, %v1681
        %v1748 = vpop.permute.xlu0 %1747
        %1751 = vset.pattern.permute.xlu0 0
        %1752 = vperm.xlu0 %1751, %v1682
        %v1753 = vpop.permute.xlu0 %1752
        %1756 = vset.pattern.permute.xlu0 0
        %1757 = vperm.xlu0 %1756, %v1683
        %v1758 = vpop.permute.xlu0 %1757
        %1761 = vset.pattern.permute.xlu0 0
        %1762 = vperm.xlu0 %1761, %v1684
        %v1763 = vpop.permute.xlu0 %1762
        %v1797 = vunpack.c.l.b16 %v1605
        %v1798 = vunpack.c.h.b16 %v1605
        %v1799 = vunpack.c.l.b16 %v1606
        %v1800 = vunpack.c.h.b16 %v1606
        %v1801 = vunpack.c.l.b16 %v1607
        %v1802 = vunpack.c.h.b16 %v1607
        %v1803 = vunpack.c.l.b16 %v1608
        %v1804 = vunpack.c.h.b16 %v1608
        %v1805 = vunpack.c.l.b16 %v1609
        %v1806 = vunpack.c.h.b16 %v1609
        %v1807 = vunpack.c.l.b16 %v1610
        %v1808 = vunpack.c.h.b16 %v1610
        %v1809 = vunpack.c.l.b16 %v1611
        %v1810 = vunpack.c.h.b16 %v1611
        %v1811 = vunpack.c.l.b16 %v1612
        %v1812 = vunpack.c.h.b16 %v1612
        %v1813 = vunpack.c.l.b16 %v1613
        %v1814 = vunpack.c.h.b16 %v1613
        %v1815 = vunpack.c.l.b16 %v1614
        %v1816 = vunpack.c.h.b16 %v1614
        %v1817 = vunpack.c.l.b16 %v1615
        %v1818 = vunpack.c.h.b16 %v1615
        %v1819 = vunpack.c.l.b16 %v1616
        %v1820 = vunpack.c.h.b16 %v1616
        %v1821 = vunpack.c.l.b16 %v1617
        %v1822 = vunpack.c.h.b16 %v1617
        %v1823 = vunpack.c.l.b16 %v1618
        %v1824 = vunpack.c.h.b16 %v1618
        %v1825 = vunpack.c.l.b16 %v1619
        %v1826 = vunpack.c.h.b16 %v1619
        %v1827 = vunpack.c.l.b16 %v1620
        %v1828 = vunpack.c.h.b16 %v1620
        %v1829 = vunpack.c.l.b16 %v1621
        %v1830 = vunpack.c.h.b16 %v1621
        %v1831 = vunpack.c.l.b16 %v1622
        %v1832 = vunpack.c.h.b16 %v1622
        %v1833 = vunpack.c.l.b16 %v1623
        %v1834 = vunpack.c.h.b16 %v1623
        %v1835 = vunpack.c.l.b16 %v1624
        %v1836 = vunpack.c.h.b16 %v1624
        %v1837 = vunpack.c.l.b16 %v1625
        %v1838 = vunpack.c.h.b16 %v1625
        %v1839 = vunpack.c.l.b16 %v1626
        %v1840 = vunpack.c.h.b16 %v1626
        %v1841 = vunpack.c.l.b16 %v1627
        %v1842 = vunpack.c.h.b16 %v1627
        %v1843 = vunpack.c.l.b16 %v1628
        %v1844 = vunpack.c.h.b16 %v1628
        %v1845 = vunpack.c.l.b16 %v1629
        %v1846 = vunpack.c.h.b16 %v1629
        %v1847 = vunpack.c.l.b16 %v1630
        %v1848 = vunpack.c.h.b16 %v1630
        %v1849 = vunpack.c.l.b16 %v1631
        %v1850 = vunpack.c.h.b16 %v1631
        %v1851 = vunpack.c.l.b16 %v1632
        %v1852 = vunpack.c.h.b16 %v1632
        %v1853 = vunpack.c.l.b16 %v1633
        %v1854 = vunpack.c.h.b16 %v1633
        %v1855 = vunpack.c.l.b16 %v1634
        %v1856 = vunpack.c.h.b16 %v1634
        %v1857 = vunpack.c.l.b16 %v1635
        %v1858 = vunpack.c.h.b16 %v1635
        %v1859 = vunpack.c.l.b16 %v1636
        %v1860 = vunpack.c.h.b16 %v1636
        %v1861 = vpack.c.b16 %v1801, %v1797
        %v1862 = vpack.c.b16 %v1802, %v1798
        %v1863 = vpack.c.b16 %v1803, %v1799
        %v1864 = vpack.c.b16 %v1804, %v1800
        %v1865 = vpack.c.b16 %v1809, %v1805
        %v1866 = vpack.c.b16 %v1810, %v1806
        %v1867 = vpack.c.b16 %v1811, %v1807
        %v1868 = vpack.c.b16 %v1812, %v1808
        %v1869 = vpack.c.b16 %v1817, %v1813
        %v1870 = vpack.c.b16 %v1818, %v1814
        %v1871 = vpack.c.b16 %v1819, %v1815
        %v1872 = vpack.c.b16 %v1820, %v1816
        %v1873 = vpack.c.b16 %v1825, %v1821
        %v1874 = vpack.c.b16 %v1826, %v1822
        %v1875 = vpack.c.b16 %v1827, %v1823
        %v1876 = vpack.c.b16 %v1828, %v1824
        %v1877 = vpack.c.b16 %v1833, %v1829
        %v1878 = vpack.c.b16 %v1834, %v1830
        %v1879 = vpack.c.b16 %v1835, %v1831
        %v1880 = vpack.c.b16 %v1836, %v1832
        %v1881 = vpack.c.b16 %v1841, %v1837
        %v1882 = vpack.c.b16 %v1842, %v1838
        %v1883 = vpack.c.b16 %v1843, %v1839
        %v1884 = vpack.c.b16 %v1844, %v1840
        %v1885 = vpack.c.b16 %v1849, %v1845
        %v1886 = vpack.c.b16 %v1850, %v1846
        %v1887 = vpack.c.b16 %v1851, %v1847
        %v1888 = vpack.c.b16 %v1852, %v1848
        %v1889 = vpack.c.b16 %v1857, %v1853
        %v1890 = vpack.c.b16 %v1858, %v1854
        %v1891 = vpack.c.b16 %v1859, %v1855
        %v1892 = vpack.c.b16 %v1860, %v1856
        %1925 = vmatprep.subr.bf16.mxu0 0
        %1926 = vmatpush1.bf16.msra.mxu0 %v1637
        %1927 = vmatprep.subr.bf16.mxu0 0
        %1928 = vmatpush1.bf16.msra.mxu0 %v1638
        %1929 = vmatprep.subr.bf16.mxu0 0
        %1930 = vmatpush1.bf16.msra.mxu0 %v1639
        %1931 = vmatprep.subr.bf16.mxu0 0
        %1932 = vmatpush1.bf16.msra.mxu0 %v1640
        %1933 = vmatprep.subr.bf16.mxu0 0
        %1934 = vmatpush1.bf16.msra.mxu0 %v1641
        %1935 = vmatprep.subr.bf16.mxu0 0
        %1936 = vmatpush1.bf16.msra.mxu0 %v1642
        %1937 = vmatprep.subr.bf16.mxu0 0
        %1938 = vmatpush1.bf16.msra.mxu0 %v1643
        %1939 = vmatprep.subr.bf16.mxu0 0
        %1940 = vmatpush1.bf16.msra.mxu0 %v1644
        %1941 = vmatprep.subr.bf16.mxu0 0
        %1942 = vmatpush1.bf16.msra.mxu0 %v1645
        %1943 = vmatprep.subr.bf16.mxu0 0
        %1944 = vmatpush1.bf16.msra.mxu0 %v1646
        %1945 = vmatprep.subr.bf16.mxu0 0
        %1946 = vmatpush1.bf16.msra.mxu0 %v1647
        %1947 = vmatprep.subr.bf16.mxu0 0
        %1948 = vmatpush1.bf16.msra.mxu0 %v1648
        %1949 = vmatprep.subr.bf16.mxu0 0
        %1950 = vmatpush1.bf16.msra.mxu0 %v1649
        %1951 = vmatprep.subr.bf16.mxu0 0
        %1952 = vmatpush1.bf16.msra.mxu0 %v1650
        %1953 = vmatprep.subr.bf16.mxu0 0
        %1954 = vmatpush1.bf16.msra.mxu0 %v1651
        %1955 = vmatprep.subr.bf16.mxu0 0
        %1956 = vmatpush1.bf16.msra.mxu0 %v1652
        %1957 = vmatprep.mubr.bf16.mxu0 %v1862
        %1958 = vmatmul.mubr.bf16.gmra.mrb[0].mxu0 %v1861
        %v1959 = vpop.f32.mrb[0].mxu0
        %v1960 = vadd.f32 %v1688, %v1959
        %v1961 = vpop.f32.mrb[0].mxu0
        %v1962 = vpop.f32.mrb[0].mxu0
        %v1963 = vadd.f32 %v1693, %v1962
        %v1964 = vpop.f32.mrb[0].mxu0
        %1965 = vmatprep.mubr.bf16.mxu0 %v1866
        %1966 = vmatmul.mubr.bf16.gmra.mrb[0].mxu0 %v1865
        %v1967 = vpop.f32.mrb[0].mxu0
        %v1968 = vadd.f32 %v1698, %v1967
        %v1969 = vpop.f32.mrb[0].mxu0
        %v1970 = vpop.f32.mrb[0].mxu0
        %v1971 = vadd.f32 %v1703, %v1970
        %v1972 = vpop.f32.mrb[0].mxu0
        %1973 = vmatprep.mubr.bf16.mxu0 %v1870
        %1974 = vmatmul.mubr.bf16.gmra.mrb[0].mxu0 %v1869
        %v1975 = vpop.f32.mrb[0].mxu0
        %v1976 = vadd.f32 %v1708, %v1975
        %v1977 = vpop.f32.mrb[0].mxu0
        %v1978 = vpop.f32.mrb[0].mxu0
        %v1979 = vadd.f32 %v1713, %v1978
        %v1980 = vpop.f32.mrb[0].mxu0
        %1981 = vmatprep.mubr.bf16.mxu0 %v1874
        %1982 = vmatmul.mubr.bf16.gmra.mrb[0].mxu0 %v1873
        %v1983 = vpop.f32.mrb[0].mxu0
        %v1984 = vadd.f32 %v1718, %v1983
        %v1985 = vpop.f32.mrb[0].mxu0
        %v1986 = vpop.f32.mrb[0].mxu0
        %v1987 = vadd.f32 %v1723, %v1986
        %v1988 = vpop.f32.mrb[0].mxu0
        %1989 = vmatprep.mubr.bf16.mxu0 %v1878
        %1990 = vmatmul.mubr.bf16.gmra.mrb[0].mxu0 %v1877
        %v1991 = vpop.f32.mrb[0].mxu0
        %v1992 = vadd.f32 %v1728, %v1991
        %v1993 = vpop.f32.mrb[0].mxu0
        %v1994 = vpop.f32.mrb[0].mxu0
        %v1995 = vadd.f32 %v1733, %v1994
        %v1996 = vpop.f32.mrb[0].mxu0
        %1997 = vmatprep.mubr.bf16.mxu0 %v1882
        %1998 = vmatmul.mubr.bf16.gmra.mrb[0].mxu0 %v1881
        %v1999 = vpop.f32.mrb[0].mxu0
        %v2000 = vadd.f32 %v1738, %v1999
        %v2001 = vpop.f32.mrb[0].mxu0
        %v2002 = vpop.f32.mrb[0].mxu0
        %v2003 = vadd.f32 %v1743, %v2002
        %v2004 = vpop.f32.mrb[0].mxu0
        %2005 = vmatprep.mubr.bf16.mxu0 %v1886
        %2006 = vmatmul.mubr.bf16.gmra.mrb[0].mxu0 %v1885
        %v2007 = vpop.f32.mrb[0].mxu0
        %v2008 = vadd.f32 %v1748, %v2007
        %v2009 = vpop.f32.mrb[0].mxu0
        %v2010 = vpop.f32.mrb[0].mxu0
        %v2011 = vadd.f32 %v1753, %v2010
        %v2012 = vpop.f32.mrb[0].mxu0
        %2013 = vmatprep.mubr.bf16.mxu0 %v1890
        %2014 = vmatmul.mubr.bf16.gmra.mrb[0].mxu0 %v1889
        %v2015 = vpop.f32.mrb[0].mxu0
        %v2016 = vadd.f32 %v1758, %v2015
        %v2017 = vpop.f32.mrb[0].mxu0
        %v2018 = vpop.f32.mrb[0].mxu0
        %v2019 = vadd.f32 %v1763, %v2018
        %v2020 = vpop.f32.mrb[0].mxu0
        %2021 = vdwg.mxu0
        %2022 = vmatprep.subr.bf16.mxu0 0
        %2023 = vmatpush1.bf16.msra.mxu0 %v1653
        %2024 = vmatprep.subr.bf16.mxu0 0
        %2025 = vmatpush1.bf16.msra.mxu0 %v1654
        %2026 = vmatprep.subr.bf16.mxu0 0
        %2027 = vmatpush1.bf16.msra.mxu0 %v1655
        %2028 = vmatprep.subr.bf16.mxu0 0
        %2029 = vmatpush1.bf16.msra.mxu0 %v1656
        %2030 = vmatprep.subr.bf16.mxu0 0
        %2031 = vmatpush1.bf16.msra.mxu0 %v1657
        %2032 = vmatprep.subr.bf16.mxu0 0
        %2033 = vmatpush1.bf16.msra.mxu0 %v1658
        %2034 = vmatprep.subr.bf16.mxu0 0
        %2035 = vmatpush1.bf16.msra.mxu0 %v1659
        %2036 = vmatprep.subr.bf16.mxu0 0
        %2037 = vmatpush1.bf16.msra.mxu0 %v1660
        %2038 = vmatprep.subr.bf16.mxu0 0
        %2039 = vmatpush1.bf16.msra.mxu0 %v1661
        %2040 = vmatprep.subr.bf16.mxu0 0
        %2041 = vmatpush1.bf16.msra.mxu0 %v1662
        %2042 = vmatprep.subr.bf16.mxu0 0
        %2043 = vmatpush1.bf16.msra.mxu0 %v1663
        %2044 = vmatprep.subr.bf16.mxu0 0
        %2045 = vmatpush1.bf16.msra.mxu0 %v1664
        %2046 = vmatprep.subr.bf16.mxu0 0
        %2047 = vmatpush1.bf16.msra.mxu0 %v1665
        %2048 = vmatprep.subr.bf16.mxu0 0
        %2049 = vmatpush1.bf16.msra.mxu0 %v1666
        %2050 = vmatprep.subr.bf16.mxu0 0
        %2051 = vmatpush1.bf16.msra.mxu0 %v1667
        %2052 = vmatprep.subr.bf16.mxu0 0
        %2053 = vmatpush1.bf16.msra.mxu0 %v1668
        %2054 = vmatprep.mubr.bf16.mxu0 %v1864
        %2055 = vmatmul.mubr.bf16.gmra.mrb[0].mxu0 %v1863
        %v2056 = vpop.f32.mrb[0].mxu0
        %v2057 = vadd.f32 %v1960, %v2056
        %v2058 = vpop.f32.mrb[0].mxu0
        %v2059 = vpop.f32.mrb[0].mxu0
        %v2060 = vadd.f32 %v1963, %v2059
        %v2061 = vpop.f32.mrb[0].mxu0
        %2062 = vmatprep.mubr.bf16.mxu0 %v1868
        %2063 = vmatmul.mubr.bf16.gmra.mrb[0].mxu0 %v1867
        %v2064 = vpop.f32.mrb[0].mxu0
        %v2065 = vadd.f32 %v1968, %v2064
        %v2066 = vpop.f32.mrb[0].mxu0
        %v2067 = vpop.f32.mrb[0].mxu0
        %v2068 = vadd.f32 %v1971, %v2067
        %v2069 = vpop.f32.mrb[0].mxu0
        %2070 = vmatprep.mubr.bf16.mxu0 %v1872
        %2071 = vmatmul.mubr.bf16.gmra.mrb[0].mxu0 %v1871
        %v2072 = vpop.f32.mrb[0].mxu0
        %v2073 = vadd.f32 %v1976, %v2072
        %v2074 = vpop.f32.mrb[0].mxu0
        %v2075 = vpop.f32.mrb[0].mxu0
        %v2076 = vadd.f32 %v1979, %v2075
        %v2077 = vpop.f32.mrb[0].mxu0
        %2078 = vmatprep.mubr.bf16.mxu0 %v1876
        %2079 = vmatmul.mubr.bf16.gmra.mrb[0].mxu0 %v1875
        %v2080 = vpop.f32.mrb[0].mxu0
        %v2081 = vadd.f32 %v1984, %v2080
        %v2082 = vpop.f32.mrb[0].mxu0
        %v2083 = vpop.f32.mrb[0].mxu0
        %v2084 = vadd.f32 %v1987, %v2083
        %v2085 = vpop.f32.mrb[0].mxu0
        %2086 = vmatprep.mubr.bf16.mxu0 %v1880
        %2087 = vmatmul.mubr.bf16.gmra.mrb[0].mxu0 %v1879
        %v2088 = vpop.f32.mrb[0].mxu0
        %v2089 = vadd.f32 %v1992, %v2088
        %v2090 = vpop.f32.mrb[0].mxu0
        %v2091 = vpop.f32.mrb[0].mxu0
        %v2092 = vadd.f32 %v1995, %v2091
        %v2093 = vpop.f32.mrb[0].mxu0
        %2094 = vmatprep.mubr.bf16.mxu0 %v1884
        %2095 = vmatmul.mubr.bf16.gmra.mrb[0].mxu0 %v1883
        %v2096 = vpop.f32.mrb[0].mxu0
        %v2097 = vadd.f32 %v2000, %v2096
        %v2098 = vpop.f32.mrb[0].mxu0
        %v2099 = vpop.f32.mrb[0].mxu0
        %v2100 = vadd.f32 %v2003, %v2099
        %v2101 = vpop.f32.mrb[0].mxu0
        %2102 = vmatprep.mubr.bf16.mxu0 %v1888
        %2103 = vmatmul.mubr.bf16.gmra.mrb[0].mxu0 %v1887
        %v2104 = vpop.f32.mrb[0].mxu0
        %v2105 = vadd.f32 %v2008, %v2104
        %v2106 = vpop.f32.mrb[0].mxu0
        %v2107 = vpop.f32.mrb[0].mxu0
        %v2108 = vadd.f32 %v2011, %v2107
        %v2109 = vpop.f32.mrb[0].mxu0
        %2110 = vmatprep.mubr.bf16.mxu0 %v1892
        %2111 = vmatmul.mubr.bf16.gmra.mrb[0].mxu0 %v1891
        %v2112 = vpop.f32.mrb[0].mxu0
        %v2113 = vadd.f32 %v2016, %v2112
        %v2114 = vpop.f32.mrb[0].mxu0
        %v2115 = vpop.f32.mrb[0].mxu0
        %v2116 = vadd.f32 %v2019, %v2115
        %v2117 = vpop.f32.mrb[0].mxu0
        %2118 = vdwg.mxu0
        %2119 = vst [vmem:[%s330] sm:$0xff] %v2057
        %2120 = vst [vmem:[%s330 + $0x8] sm:$0xff] %v2060
        %2121 = vst [vmem:[%s330 + $0x10] sm:$0xff] %v2065
        %2122 = vst [vmem:[%s330 + $0x18] sm:$0xff] %v2068
        %2123 = vst [vmem:[%s330 + $0x20] sm:$0xff] %v2073
        %2124 = vst [vmem:[%s330 + $0x28] sm:$0xff] %v2076
        %2125 = vst [vmem:[%s330 + $0x30] sm:$0xff] %v2081
        %2126 = vst [vmem:[%s330 + $0x38] sm:$0xff] %v2084
        %2127 = vst [vmem:[%s330 + $0x40] sm:$0xff] %v2089
        %2128 = vst [vmem:[%s330 + $0x48] sm:$0xff] %v2092
        %2129 = vst [vmem:[%s330 + $0x50] sm:$0xff] %v2097
        %2130 = vst [vmem:[%s330 + $0x58] sm:$0xff] %v2100
        %2131 = vst [vmem:[%s330 + $0x60] sm:$0xff] %v2105
        %2132 = vst [vmem:[%s330 + $0x68] sm:$0xff] %v2108
        %2133 = vst [vmem:[%s330 + $0x70] sm:$0xff] %v2113
        %2134 = vst [vmem:[%s330 + $0x78] sm:$0xff] %v2116
        %s2135 = sand.u32 %s150, 1
        %s2136 = sand.u32 %s150, 1
        %s2137 = smul.addr %s2136, 128
        %s2138 = scalar_lea.vmem [#allocation3], %s2137
        // Predicated region
        $region79: #{cmlp_forward.1} parent=73 // pred_check
          %p2139 = pneg %p160
        $region80: #{cmlp_forward.1} parent=73 // pred_check_branch
          %2141 = sbr.rel (%p2139) target = $region82
        $region81: #{cmlp_forward.1} parent=73 // pred_region
          %s2142 = smul.addr %s20, 32
          %s2143 = sadd.s32 %s21, %s2142
          %s2144 = smul.addr %s2143, 8
          %s2145 = scalar_lea.vmem %s5, %s2144
          // Predicated region
          $region83: #{cmlp_forward.1} parent=81 // pred_check
            _
          $region84: #{cmlp_forward.1} parent=81 // pred_check_branch
            %2147 = sbr.rel (0) target = $region86
          $region85: #{cmlp_forward.1} parent=81 // pred_region
            // Predicated region
            $region87: #{cmlp_forward.1} parent=85 // pred_check
              _
            $region88: #{cmlp_forward.1} parent=85 // pred_check_branch
              %2149 = sbr.rel (0) target = $region90
            $region89: #{cmlp_forward.1} parent=85 // pred_region
              // Predicated region
              $region102: #{cmlp_forward.1} parent=89 // pred_check
                _
              $region103: #{cmlp_forward.1} parent=89 // pred_check_branch
                %2194 = sbr.rel (0) target = $region105
              $region104: #{cmlp_forward.1} parent=89 // pred_region
                loop: start=0, step=1, limit=1
                $region106: #{cmlp_forward.1} parent=104 // loop_pre_header
                  _
                $region107: #{cmlp_forward.1} parent=104 // loop_header
                  %s2196 = sphi 0, %s2200
                  %p2197 = scmp.ge.s32.totalorder %s2196, 1
                  %s2201 = sphi %s2138, %s2138
                  %s2202 = sphi %s2145, %s2145
                $region108: #{cmlp_forward.1} parent=104 // loop_header_branch
                  %2199 = sbr.rel (%p2197) target = $region112
                $region109: #{cmlp_forward.1} parent=104 // loop_body
                  %v2203 = vld [vmem:[%s2201] sm:$0xff]
                  %2204 = vst [vmem:[%s2202] sm:$0xff] %v2203
                  %v2205 = vld [vmem:[%s2201 + $0x8] sm:$0xff]
                  %2206 = vst [vmem:[%s2202 + $0x10] sm:$0xff] %v2205
                  %v2207 = vld [vmem:[%s2201 + $0x10] sm:$0xff]
                  %2208 = vst [vmem:[%s2202 + $0x20] sm:$0xff] %v2207
                  %v2209 = vld [vmem:[%s2201 + $0x18] sm:$0xff]
                  %2210 = vst [vmem:[%s2202 + $0x30] sm:$0xff] %v2209
                  %v2211 = vld [vmem:[%s2201 + $0x20] sm:$0xff]
                  %2212 = vst [vmem:[%s2202 + $0x40] sm:$0xff] %v2211
                  %v2213 = vld [vmem:[%s2201 + $0x28] sm:$0xff]
                  %2214 = vst [vmem:[%s2202 + $0x50] sm:$0xff] %v2213
                  %v2215 = vld [vmem:[%s2201 + $0x30] sm:$0xff]
                  %2216 = vst [vmem:[%s2202 + $0x60] sm:$0xff] %v2215
                  %v2217 = vld [vmem:[%s2201 + $0x38] sm:$0xff]
                  %2218 = vst [vmem:[%s2202 + $0x70] sm:$0xff] %v2217
                  %v2219 = vld [vmem:[%s2201 + $0x40] sm:$0xff]
                  %2220 = vst [vmem:[%s2202 + $0x80] sm:$0xff] %v2219
                  %v2221 = vld [vmem:[%s2201 + $0x48] sm:$0xff]
                  %2222 = vst [vmem:[%s2202 + $0x90] sm:$0xff] %v2221
                  %v2223 = vld [vmem:[%s2201 + $0x50] sm:$0xff]
                  %2224 = vst [vmem:[%s2202 + $0xa0] sm:$0xff] %v2223
                  %v2225 = vld [vmem:[%s2201 + $0x58] sm:$0xff]
                  %2226 = vst [vmem:[%s2202 + $0xb0] sm:$0xff] %v2225
                  %v2227 = vld [vmem:[%s2201 + $0x60] sm:$0xff]
                  %2228 = vst [vmem:[%s2202 + $0xc0] sm:$0xff] %v2227
                  %v2229 = vld [vmem:[%s2201 + $0x68] sm:$0xff]
                  %2230 = vst [vmem:[%s2202 + $0xd0] sm:$0xff] %v2229
                  %v2231 = vld [vmem:[%s2201 + $0x70] sm:$0xff]
                  %2232 = vst [vmem:[%s2202 + $0xe0] sm:$0xff] %v2231
                  %v2233 = vld [vmem:[%s2201 + $0x78] sm:$0xff]
                  %2234 = vst [vmem:[%s2202 + $0xf0] sm:$0xff] %v2233
                $region110: #{cmlp_forward.1} parent=104 // loop_footer
                  %s2200 = sadd.s32 1, %s2196
                $region111: #{cmlp_forward.1} parent=104 // loop_footer_branch
                  %2195 = sbr.rel target = $region107
                $region112: #{cmlp_forward.1} parent=104 // loop_exit
                  _
              $region105: #{cmlp_forward.1} parent=89 // pred_fallthru
                _
              // Predicated region
              $region113: #{cmlp_forward.1} parent=89 // pred_check
                _
              $region114: #{cmlp_forward.1} parent=89 // pred_check_branch
                %2236 = sbr.rel target = $region116
              $region115: #{cmlp_forward.1} parent=89 // pred_region
                _
              $region116: #{cmlp_forward.1} parent=89 // pred_fallthru
                _
            $region90: #{cmlp_forward.1} parent=85 // pred_fallthru
              _
            // Predicated region
            $region91: #{cmlp_forward.1} parent=85 // pred_check
              _
            $region92: #{cmlp_forward.1} parent=85 // pred_check_branch
              %2151 = sbr.rel target = $region94
            $region93: #{cmlp_forward.1} parent=85 // pred_region
              loop: start=0, step=1, limit=1
              $region95: #{cmlp_forward.1} parent=93 // loop_pre_header
                _
              $region96: #{cmlp_forward.1} parent=93 // loop_header
                %s2154 = sphi 0, %s2158
                %p2155 = scmp.ge.s32.totalorder %s2154, 1
                %s2159 = sphi %s2138, %s2138
                %s2160 = sphi %s2145, %s2145
              $region97: #{cmlp_forward.1} parent=93 // loop_header_branch
                %2157 = sbr.rel (%p2155) target = $region101
              $region98: #{cmlp_forward.1} parent=93 // loop_body
                %v2161 = vld [vmem:[%s2159] sm:$0xff]
                %2162 = vst [vmem:[%s2160] sm:$0xff] %v2161
                %v2163 = vld [vmem:[%s2159 + $0x8] sm:$0xff]
                %2164 = vst [vmem:[%s2160 + $0x10] sm:$0xff] %v2163
                %v2165 = vld [vmem:[%s2159 + $0x10] sm:$0xff]
                %2166 = vst [vmem:[%s2160 + $0x20] sm:$0xff] %v2165
                %v2167 = vld [vmem:[%s2159 + $0x18] sm:$0xff]
                %2168 = vst [vmem:[%s2160 + $0x30] sm:$0xff] %v2167
                %v2169 = vld [vmem:[%s2159 + $0x20] sm:$0xff]
                %2170 = vst [vmem:[%s2160 + $0x40] sm:$0xff] %v2169
                %v2171 = vld [vmem:[%s2159 + $0x28] sm:$0xff]
                %2172 = vst [vmem:[%s2160 + $0x50] sm:$0xff] %v2171
                %v2173 = vld [vmem:[%s2159 + $0x30] sm:$0xff]
                %2174 = vst [vmem:[%s2160 + $0x60] sm:$0xff] %v2173
                %v2175 = vld [vmem:[%s2159 + $0x38] sm:$0xff]
                %2176 = vst [vmem:[%s2160 + $0x70] sm:$0xff] %v2175
                %v2177 = vld [vmem:[%s2159 + $0x40] sm:$0xff]
                %2178 = vst [vmem:[%s2160 + $0x80] sm:$0xff] %v2177
                %v2179 = vld [vmem:[%s2159 + $0x48] sm:$0xff]
                %2180 = vst [vmem:[%s2160 + $0x90] sm:$0xff] %v2179
                %v2181 = vld [vmem:[%s2159 + $0x50] sm:$0xff]
                %2182 = vst [vmem:[%s2160 + $0xa0] sm:$0xff] %v2181
                %v2183 = vld [vmem:[%s2159 + $0x58] sm:$0xff]
                %2184 = vst [vmem:[%s2160 + $0xb0] sm:$0xff] %v2183
                %v2185 = vld [vmem:[%s2159 + $0x60] sm:$0xff]
                %2186 = vst [vmem:[%s2160 + $0xc0] sm:$0xff] %v2185
                %v2187 = vld [vmem:[%s2159 + $0x68] sm:$0xff]
                %2188 = vst [vmem:[%s2160 + $0xd0] sm:$0xff] %v2187
                %v2189 = vld [vmem:[%s2159 + $0x70] sm:$0xff]
                %2190 = vst [vmem:[%s2160 + $0xe0] sm:$0xff] %v2189
                %v2191 = vld [vmem:[%s2159 + $0x78] sm:$0xff]
                %2192 = vst [vmem:[%s2160 + $0xf0] sm:$0xff] %v2191
              $region99: #{cmlp_forward.1} parent=93 // loop_footer
                %s2158 = sadd.s32 1, %s2154
              $region100: #{cmlp_forward.1} parent=93 // loop_footer_branch
                %2153 = sbr.rel target = $region96
              $region101: #{cmlp_forward.1} parent=93 // loop_exit
                _
            $region94: #{cmlp_forward.1} parent=85 // pred_fallthru
              _
          $region86: #{cmlp_forward.1} parent=81 // pred_fallthru
            _
          %2237 = vnop
        $region82: #{cmlp_forward.1} parent=73 // pred_fallthru
          _
      $region74: #{cmlp_forward.1} parent=5 // pred_fallthru
        _
      %p2238 = scmp.le.s32.totalorder 2, %s11
      // Predicated region
      $region117: #{cmlp_forward.1} parent=5 // pred_check
        %p2239 = pneg %p2238
      $region118: #{cmlp_forward.1} parent=5 // pred_check_branch
        %2241 = sbr.rel (%p2239) target = $region120
      $region119: #{cmlp_forward.1} parent=5 // pred_region
        %s2242 = ssub.s32 %s11, 2
        // Predicated region
        $region121: #{cmlp_forward.1} parent=119 // pred_check
          %p2243 = pneg %p166
        $region122: #{cmlp_forward.1} parent=119 // pred_check_branch
          %2245 = sbr.rel (%p2243) target = $region124
        $region123: #{cmlp_forward.1} parent=119 // pred_region
          %s2246 = sand.u32 %s151, 1
          %s2247 = sand.u32 %s151, 1
          %s2248 = smul.addr %s2247, 128
          %s2249 = scalar_lea.vmem [#allocation3], %s2248
        $region124: #{cmlp_forward.1} parent=119 // pred_fallthru
          _
      $region120: #{cmlp_forward.1} parent=5 // pred_fallthru
        _
    $region6: #{cmlp_forward.1} parent=1 // loop_footer
      %s15 = sadd.s32 1, %s11
    $region7: #{cmlp_forward.1} parent=1 // loop_footer_branch
      %10 = sbr.rel target = $region3
    $region8: #{cmlp_forward.1} parent=1 // loop_exit
      _

</llo_original>
